<compile_context>
chip_gen: v7x
topology: tpu7x:2x2x1
jax: 0.10.0
libtpu: 0.0.40
codegen_flags: <defaults>
</compile_context>

<pallas_src>
import functools
import math

import jax
import jax.numpy as jnp
from jax.experimental import pallas as pl
from jax.experimental.pallas import tpu as pltpu

_VMEM_LIMIT = 32 * 1024 * 1024


def _round_up(x, m):
    return (x + m - 1) // m * m


def _pick_tile(n, cap, align=128):
    """Largest multiple of `align` that divides n and is <= cap (n % align == 0).
    With the default caps and 256-padded weights this lands on 256-multiples
    (768 / 1024 / ...) for all real BERT dims, so K/N are never padded."""
    best = align
    t = align
    top = min(n, cap)
    while t <= top:
        if n % t == 0:
            best = t
        t += align
    return best


# ----------------------------------------------------------------------------
# Prepared linear layer: weight pre-transposed to (K, N), padded, bf16.
# `n` (true output width) is static pytree aux_data so it stays a Python int
# under jit.
# ----------------------------------------------------------------------------

@jax.tree_util.register_pytree_node_class
class Lin:
    def __init__(self, w, b, n):
        self.w, self.b, self.n = w, b, n

    def tree_flatten(self):
        return (self.w, self.b), self.n

    @classmethod
    def tree_unflatten(cls, n, children):
        return cls(children[0], children[1], n)


def _make_lin(w, b):
    """w: (N, K) f32 PyTorch layout; b: (N,) f32 or None."""
    N, K = w.shape
    Kp = _round_up(K, 128)
    Np = _round_up(N, 256)
    wt = jnp.transpose(w)                                    # (K, N)
    wt = jnp.pad(wt, ((0, Kp - K), (0, Np - N))).astype(jnp.bfloat16)
    b = jnp.zeros((N,), jnp.float32) if b is None else b.astype(jnp.float32)
    b = jnp.pad(b, (0, Np - N)).reshape(1, Np)
    return Lin(wt, b, N)


# ----------------------------------------------------------------------------
# Tiled linear kernel:  y = act(x @ w + b),   x:(M,K) bf16, w:(K,N) bf16
# ----------------------------------------------------------------------------

def _linear_kernel(x_ref, w_ref, b_ref, o_ref, acc_ref, *, act):
    @pl.when(pl.program_id(2) == 0)
    def _():
        acc_ref[...] = jnp.zeros_like(acc_ref)

    acc_ref[...] += jnp.dot(x_ref[...], w_ref[...],
                            preferred_element_type=jnp.float32)

    @pl.when(pl.program_id(2) == pl.num_programs(2) - 1)
    def _():
        y = acc_ref[...] + b_ref[...]                        # f32
        if act == "relu":
            y = jnp.maximum(y, 0.0)
        elif act == "tanh":
            y = jnp.tanh(y)
        elif act == "gelu":
            # HuggingFace gelu: x * 0.5 * (1 + erf(x / sqrt(2)))
            y = y * 0.5 * (1.0 + jax.lax.erf(y / jnp.float32(math.sqrt(2.0))))
        o_ref[...] = y.astype(o_ref.dtype)


def linear(x, lin, act="none", out_dtype=jnp.bfloat16, *, tm=512, tn=768, tk=1024):
    """y = act(x @ W + b).  lin.w is pre-transposed/padded (Kp, Np) bf16."""
    w, b, N = lin.w, lin.b, lin.n
    Kp, Np = w.shape
    orig = x.shape
    K = orig[-1]
    M = int(math.prod(orig[:-1]))

    x2 = x.reshape(M, K).astype(jnp.bfloat16)   # no-op when already bf16
    tm = min(tm, _round_up(M, 16))              # bf16 packs 16 sublanes / vreg
    Mp = _round_up(M, tm)
    if (Mp, Kp) != (M, K):
        x2 = jnp.pad(x2, ((0, Mp - M), (0, Kp - K)))

    tn = _pick_tile(Np, tn)
    tk = _pick_tile(Kp, tk)
    grid = (Mp // tm, Np // tn, Kp // tk)

    out = pl.pallas_call(
        functools.partial(_linear_kernel, act=act),
        out_shape=jax.ShapeDtypeStruct((Mp, Np), out_dtype),
        grid=grid,
        in_specs=[
            pl.BlockSpec((tm, tk), lambda i, j, k: (i, k)),
            pl.BlockSpec((tk, tn), lambda i, j, k: (k, j)),
            pl.BlockSpec((1, tn), lambda i, j, k: (0, j)),
        ],
        out_specs=pl.BlockSpec((tm, tn), lambda i, j, k: (i, j)),
        scratch_shapes=[pltpu.VMEM((tm, tn), jnp.float32)],
        compiler_params=pltpu.CompilerParams(
            dimension_semantics=("parallel", "parallel", "arbitrary"),
            vmem_limit_bytes=_VMEM_LIMIT),
    )(x2, w, b)

    if (Mp, Np) != (M, N):
        out = out[:M, :N]
    return out.reshape(*orig[:-1], N)


# ----------------------------------------------------------------------------
# LayerNorm kernels (row-tiled; optional fused residual add; bf16 output)
# ----------------------------------------------------------------------------

def _ln_body(x, g_ref, b_ref, o_ref, eps):
    mu = jnp.mean(x, axis=-1, keepdims=True)
    xc = x - mu
    var = jnp.mean(xc * xc, axis=-1, keepdims=True)
    y = xc * jax.lax.rsqrt(var + eps) * g_ref[...] + b_ref[...]
    o_ref[...] = y.astype(o_ref.dtype)


def _ln_kernel(x_ref, g_ref, b_ref, o_ref, *, eps):
    _ln_body(x_ref[...].astype(jnp.float32), g_ref, b_ref, o_ref, eps)


def _add_ln_kernel(x_ref, r_ref, g_ref, b_ref, o_ref, *, eps):
    x = x_ref[...].astype(jnp.float32) + r_ref[...].astype(jnp.float32)
    _ln_body(x, g_ref, b_ref, o_ref, eps)


def layernorm(x, gamma, beta, residual=None, eps=1e-5, *, tm=512,
              out_dtype=jnp.bfloat16):
    """LN(x + residual) with the residual add fused into the kernel."""
    orig = x.shape
    D = orig[-1]
    M = int(math.prod(orig[:-1]))

    x2 = x.reshape(M, D)
    tm = min(tm, _round_up(M, 8))
    Mp = _round_up(M, tm)
    if Mp != M:
        x2 = jnp.pad(x2, ((0, Mp - M), (0, 0)))
    g2 = gamma.reshape(1, D).astype(jnp.float32)
    b2 = beta.reshape(1, D).astype(jnp.float32)

    row_spec = pl.BlockSpec((tm, D), lambda i: (i, 0))
    vec_spec = pl.BlockSpec((1, D), lambda i: (0, 0))
    cparams = pltpu.CompilerParams(dimension_semantics=("parallel",),
                                   vmem_limit_bytes=_VMEM_LIMIT)
    grid = (Mp // tm,)

    if residual is None:
        out = pl.pallas_call(
            functools.partial(_ln_kernel, eps=eps),
            out_shape=jax.ShapeDtypeStruct((Mp, D), out_dtype),
            grid=grid,
            in_specs=[row_spec, vec_spec, vec_spec],
            out_specs=row_spec,
            compiler_params=cparams,
        )(x2, g2, b2)
    else:
        r2 = residual.reshape(M, D)
        if Mp != M:
            r2 = jnp.pad(r2, ((0, Mp - M), (0, 0)))
        out = pl.pallas_call(
            functools.partial(_add_ln_kernel, eps=eps),
            out_shape=jax.ShapeDtypeStruct((Mp, D), out_dtype),
            grid=grid,
            in_specs=[row_spec, row_spec, vec_spec, vec_spec],
            out_specs=row_spec,
            compiler_params=cparams,
        )(x2, r2, g2, b2)

    if Mp != M:
        out = out[:M]
    return out.reshape(orig)


# ----------------------------------------------------------------------------
# Attention kernels.  The 1/sqrt(d_head) scale is pre-folded into the Q rows
# of in_proj (prepare_params), so no scaling happens here.
# ----------------------------------------------------------------------------

def _mha_heads(q, k, v, n_heads):
    """q: (Tq, D); k, v: (S, D).  Returns (Tq, D) f32."""
    Tq, D = q.shape
    Dh = D // n_heads
    outs = []
    for h in range(n_heads):                      # static unrolled loop
        lo = h * Dh
        qh = q[:, lo:lo + Dh].astype(jnp.bfloat16)
        kh = k[:, lo:lo + Dh].astype(jnp.bfloat16)
        vh = v[:, lo:lo + Dh].astype(jnp.bfloat16)
        s = jax.lax.dot_general(qh, kh, (((1,), (1,)), ((), ())),
                                preferred_element_type=jnp.float32)
        m = jnp.max(s, axis=-1, keepdims=True)
        p = jnp.exp(s - m)                        # f32, unnormalized
        inv = pl.reciprocal(jnp.sum(p, axis=-1, keepdims=True), approx=True)
        oh = jnp.dot(p.astype(jnp.bfloat16), vh,
                     preferred_element_type=jnp.float32)     # (Tq, Dh) f32
        outs.append(oh * inv)                     # fold softmax denom into Dh cols
    return jnp.concatenate(outs, axis=-1)         # (Tq, D) -> one dense store


def _attn_split_kernel(q_ref, k_ref, v_ref, o_ref, *, n_heads):
    o = _mha_heads(q_ref[0], k_ref[0], v_ref[0], n_heads)
    o_ref[...] = o[None].astype(o_ref.dtype)


def _attn_fused_kernel(qkv_ref, o_ref, *, n_heads, d_model):
    x = qkv_ref[0]
    D = d_model
    o = _mha_heads(x[:, :D], x[:, D:2 * D], x[:, 2 * D:3 * D], n_heads)
    o_ref[...] = o[None].astype(o_ref.dtype)


def attention(qkv, n_heads, d_model):
    """qkv: (B, S, 3*d_model) fused QKV projection (no jnp.split copies)."""
    B, S, D3 = qkv.shape
    D = d_model
    out_dtype = jnp.bfloat16

    if D % 128 == 0 and D3 == 3 * D and S % 8 == 0:
        # Lane-aligned path: BlockSpec picks Q/K/V directly as last-axis
        # blocks of the fused array; Q (and the output) is tiled over rows so
        # the grid has two parallel axes (megacore / v7x friendly).
        tq = S
        for cand in (256, 128, 64, 32, 16, 8):
            if S % cand == 0:
                tq = cand
                break
        q_spec = pl.BlockSpec((1, tq, D), lambda b, i: (b, i, 0))
        k_spec = pl.BlockSpec((1, S, D), lambda b, i: (b, 0, 1))
        v_spec = pl.BlockSpec((1, S, D), lambda b, i: (b, 0, 2))
        o_spec = pl.BlockSpec((1, tq, D), lambda b, i: (b, i, 0))
        return pl.pallas_call(
            functools.partial(_attn_split_kernel, n_heads=n_heads),
            out_shape=jax.ShapeDtypeStruct((B, S, D), out_dtype),
            grid=(B, S // tq),
            in_specs=[q_spec, k_spec, v_spec],
            out_specs=o_spec,
            compiler_params=pltpu.CompilerParams(
                dimension_semantics=("parallel", "parallel"),
                vmem_limit_bytes=_VMEM_LIMIT),
        )(qkv, qkv, qkv)

    # Fallback for unaligned d_model (e.g. tiny demo shapes): one fused
    # (1, S, 3D) block per batch element, Q/K/V sliced in VMEM.
    in_spec = pl.BlockSpec((1, S, D3), lambda b: (b, 0, 0))
    out_spec = pl.BlockSpec((1, S, D), lambda b: (b, 0, 0))
    return pl.pallas_call(
        functools.partial(_attn_fused_kernel, n_heads=n_heads, d_model=D),
        out_shape=jax.ShapeDtypeStruct((B, S, D), out_dtype),
        grid=(B,),
        in_specs=[in_spec],
        out_specs=out_spec,
        compiler_params=pltpu.CompilerParams(
            dimension_semantics=("parallel",),
            vmem_limit_bytes=_VMEM_LIMIT),
    )(qkv)


# ----------------------------------------------------------------------------
# Parameters (PyTorch layout) + one-time kernel-layout preparation
# ----------------------------------------------------------------------------

def init_params(key, vocab_size, d_model, maxlen, n_segments, n_layers,
                n_heads, d_ff, num_classes):
    keys = iter(jax.random.split(key, 64 + 8 * n_layers))

    def nrm(shape, scale=0.02):
        return jax.random.normal(next(keys), shape, jnp.float32) * scale

    p = {
        "tok_embed": nrm((vocab_size, d_model)),
        "pos_embed": nrm((maxlen, d_model)),
        "seg_embed": nrm((n_segments, d_model)),
        "emb_ln_g": jnp.ones((d_model,), jnp.float32),
        "emb_ln_b": jnp.zeros((d_model,), jnp.float32),
        "fc_w": nrm((d_model, d_model)),
        "fc_b": jnp.zeros((d_model,), jnp.float32),
        "classifier_w": nrm((num_classes, d_model)),
        "classifier_b": jnp.zeros((num_classes,), jnp.float32),
        "linear_w": nrm((d_model, d_model)),
        "linear_b": jnp.zeros((d_model,), jnp.float32),
        "norm_g": jnp.ones((d_model,), jnp.float32),
        "norm_b": jnp.zeros((d_model,), jnp.float32),
        "decoder_bias": jnp.zeros((vocab_size,), jnp.float32),
        "layers": [],
    }
    for _ in range(n_layers):
        p["layers"].append(dict(
            in_proj_w=nrm((3 * d_model, d_model)),
            in_proj_b=jnp.zeros((3 * d_model,), jnp.float32),
            out_proj_w=nrm((d_model, d_model)),
            out_proj_b=jnp.zeros((d_model,), jnp.float32),
            ln1_g=jnp.ones((d_model,), jnp.float32),
            ln1_b=jnp.zeros((d_model,), jnp.float32),
            lin1_w=nrm((d_ff, d_model)),
            lin1_b=jnp.zeros((d_ff,), jnp.float32),
            lin2_w=nrm((d_model, d_ff)),
            lin2_b=jnp.zeros((d_model,), jnp.float32),
            ln2_g=jnp.ones((d_model,), jnp.float32),
            ln2_b=jnp.zeros((d_model,), jnp.float32),
        ))
    return p


def prepare_params(p, n_heads):
    """One-time: transpose every nn.Linear weight to (K, N), pad to tile
    multiples (K->128, N->256), cast to bf16, and fold the attention
    1/sqrt(d_head) scale into the Q rows of in_proj."""
    d_model = p["tok_embed"].shape[1]
    scale = 1.0 / math.sqrt(d_model // n_heads)

    q = {
        "tok_embed": p["tok_embed"],
        "pos_embed": p["pos_embed"],
        "seg_embed": p["seg_embed"],
        "emb_ln_g": p["emb_ln_g"], "emb_ln_b": p["emb_ln_b"],
        "fc": _make_lin(p["fc_w"], p["fc_b"]),
        "classifier": _make_lin(p["classifier_w"], p["classifier_b"]),
        "linear": _make_lin(p["linear_w"], p["linear_b"]),
        "norm_g": p["norm_g"], "norm_b": p["norm_b"],
        # tied decoder: weight = tok_embed (vocab, d_model) in PyTorch layout
        "decoder": _make_lin(p["tok_embed"], p["decoder_bias"]),
        "layers": [],
    }
    for l in p["layers"]:
        in_w = l["in_proj_w"].at[:d_model].multiply(scale)   # pre-scale Q
        in_b = l["in_proj_b"].at[:d_model].multiply(scale)
        q["layers"].append(dict(
            in_proj=_make_lin(in_w, in_b),
            out_proj=_make_lin(l["out_proj_w"], l["out_proj_b"]),
            ln1_g=l["ln1_g"], ln1_b=l["ln1_b"],
            lin1=_make_lin(l["lin1_w"], l["lin1_b"]),
            lin2=_make_lin(l["lin2_w"], l["lin2_b"]),
            ln2_g=l["ln2_g"], ln2_b=l["ln2_b"],
        ))
    return q


# ----------------------------------------------------------------------------
# Forward pass
# ----------------------------------------------------------------------------

def encoder_layer(x, l, n_heads, d_model):
    """nn.TransformerEncoderLayer, post-norm, relu activation, eval mode."""
    qkv = linear(x, l["in_proj"])                         # (B, S, 3D) bf16
    attn = attention(qkv, n_heads, d_model)               # (B, S, D)  bf16
    attn = linear(attn, l["out_proj"])
    x = layernorm(attn, l["ln1_g"], l["ln1_b"], residual=x)   # LN(x + attn)

    ff = linear(x, l["lin1"], act="relu")                 # linear1 + relu
    ff = linear(ff, l["lin2"])                            # linear2
    x = layernorm(ff, l["ln2_g"], l["ln2_b"], residual=x)     # LN(x + ff)
    return x


def bert_forward(params, input_ids, segment_ids, masked_pos, n_heads):
    B, S = input_ids.shape
    D = params["tok_embed"].shape[1]

    # Embedding: tok + pos + seg, then LayerNorm (Pallas).
    tok = jnp.take(params["tok_embed"], input_ids, axis=0)
    pos = params["pos_embed"][:S][None, :, :]
    seg = jnp.take(params["seg_embed"], segment_ids, axis=0)
    x = layernorm(tok + pos + seg, params["emb_ln_g"], params["emb_ln_b"])

    # Transformer encoder stack.
    for l in params["layers"]:
        x = encoder_layer(x, l, n_heads, D)

    # Pooler + classifier: tanh(fc(output[:, 0])) -> classifier
    h_pooled = linear(x[:, 0, :], params["fc"], act="tanh")
    logits_clsf = linear(h_pooled, params["classifier"], out_dtype=jnp.float32)

    # Masked LM head: gather -> gelu(linear) -> layernorm -> tied decoder + bias
    idx = jnp.broadcast_to(masked_pos[:, :, None].astype(jnp.int32),
                           (B, masked_pos.shape[1], D))
    h_masked = jnp.take_along_axis(x, idx, axis=1)        # torch.gather(dim=1)
    h_masked = linear(h_masked, params["linear"], act="gelu")
    h_masked = layernorm(h_masked, params["norm_g"], params["norm_b"])
    logits_lm = linear(h_masked, params["decoder"], out_dtype=jnp.float32,
                       tn=1024)                           # big-vocab GEMM: wide tn

    return logits_lm, logits_clsf


# ----------------------------------------------------------------------------
# Demo
# ----------------------------------------------------------------------------

if __name__ == "__main__":
    vocab_size, d_model, maxlen, n_segments = 50, 32, 16, 2
    n_layers, n_heads, d_ff, num_classes = 2, 4, 64, 2
    B, S, n_pred = 2, 8, 3

    key = jax.random.PRNGKey(0)
    k_param, k_ids, k_seg, k_pos, k_attn = jax.random.split(key, 5)

    raw_params = init_params(k_param, vocab_size, d_model, maxlen, n_segments,
                             n_layers, n_heads, d_ff, num_classes)
    params = prepare_params(raw_params, n_heads)   # one-time transpose/pad/bf16

    input_ids = jax.random.randint(k_ids, (B, S), 0, vocab_size, dtype=jnp.int32)
    segment_ids = jax.random.randint(k_seg, (B, S), 0, n_segments, dtype=jnp.int32)
    masked_pos = jax.random.randint(k_pos, (B, n_pred), 0, S, dtype=jnp.int32)

    fwd = jax.jit(functools.partial(bert_forward, n_heads=n_heads))
    logits_lm, logits_clsf = fwd(params, input_ids, segment_ids, masked_pos)
    jax.block_until_ready((logits_lm, logits_clsf))
    assert logits_lm.shape == (B, n_pred, vocab_size)
    assert logits_clsf.shape == (B, num_classes)

    # Also exercise the lane-aligned attention path (d_model % 128 == 0) and
    # check it against a pure-jnp reference (kernel assumes pre-scaled Q).
    qkv_t = (0.5 * jax.random.normal(k_attn, (2, 16, 3 * 128), jnp.float32)
             ).astype(jnp.bfloat16)
    out_t = attention(qkv_t, n_heads=2, d_model=128)
    jax.block_until_ready(out_t)
    qf = qkv_t.astype(jnp.float32)
    q_t, k_t, v_t = qf[..., :128], qf[..., 128:256], qf[..., 256:]

    def _ref_heads(q, k, v, h):
        B_, S_, D_ = q.shape
        dh = D_ // h
        q = q.reshape(B_, S_, h, dh).transpose(0, 2, 1, 3)
        k = k.reshape(B_, S_, h, dh).transpose(0, 2, 1, 3)
        v = v.reshape(B_, S_, h, dh).transpose(0, 2, 1, 3)
        p = jax.nn.softmax(jnp.einsum("bhqd,bhkd->bhqk", q, k), axis=-1)
        o = jnp.einsum("bhqk,bhkd->bhqd", p, v)
        return o.transpose(0, 2, 1, 3).reshape(B_, S_, D_)

    ref = _ref_heads(q_t, k_t, v_t, 2)
    err = float(jnp.max(jnp.abs(out_t.astype(jnp.float32) - ref)))
    assert err < 0.1, f"aligned attention mismatch: max abs err {err}"

    print("KERNEL_OK")
</pallas_src>

<mosaic_0001>
module attributes {stable_mosaic.version = 11 : i64} {
  func.func @_ln_kernel(%arg0: i32, %arg1: memref<16x32xf32, #tpu.memory_space<vmem>>, %arg2: memref<1x32xf32, #tpu.memory_space<vmem>>, %arg3: memref<1x32xf32, #tpu.memory_space<vmem>>, %arg4: memref<16x32xbf16, #tpu.memory_space<vmem>>) attributes {dimension_semantics = [#tpu.dimension_semantics<parallel>], iteration_bounds = array<i64: 1>, scalar_prefetch = 0 : i64, scratch_operands = 0 : i64, tpu.core_type = #tpu.core_type<tc>, window_params = [{transform_indices = @transform_0, window_bounds = array<i64: 16, 32>}, {pipeline_mode = #tpu.pipeline_mode<synchronous>, transform_indices = @transform_1, window_bounds = array<i64: 1, 32>}, {pipeline_mode = #tpu.pipeline_mode<synchronous>, transform_indices = @transform_2, window_bounds = array<i64: 1, 32>}, {transform_indices = @transform_3, window_bounds = array<i64: 16, 32>}]} {
    %c0 = arith.constant 0 : index
    %c0_0 = arith.constant 0 : index
    %0 = vector.load %arg1[%c0, %c0_0] : memref<16x32xf32, #tpu.memory_space<vmem>>, vector<16x32xf32>
    %cst = arith.constant dense<0.000000e+00> : vector<16xf32>
    %1 = vector.multi_reduction <add>, %0, %cst [1] : vector<16x32xf32> to vector<16xf32>
    %2 = vector.shape_cast %1 : vector<16xf32> to vector<16x1xf32>
    %cst_1 = arith.constant 3.200000e+01 : f32
    %3 = vector.broadcast %cst_1 : f32 to vector<16x1xf32>
    %4 = arith.divf %2, %3 : vector<16x1xf32>
    %5 = vector.broadcast %4 : vector<16x1xf32> to vector<16x32xf32>
    %6 = arith.subf %0, %5 : vector<16x32xf32>
    %7 = arith.mulf %6, %6 : vector<16x32xf32>
    %cst_2 = arith.constant dense<0.000000e+00> : vector<16xf32>
    %8 = vector.multi_reduction <add>, %7, %cst_2 [1] : vector<16x32xf32> to vector<16xf32>
    %9 = vector.shape_cast %8 : vector<16xf32> to vector<16x1xf32>
    %cst_3 = arith.constant 3.200000e+01 : f32
    %10 = vector.broadcast %cst_3 : f32 to vector<16x1xf32>
    %11 = arith.divf %9, %10 : vector<16x1xf32>
    %cst_4 = arith.constant 9.99999974E-6 : f32
    %12 = vector.broadcast %cst_4 : f32 to vector<16x1xf32>
    %13 = arith.addf %11, %12 : vector<16x1xf32>
    %14 = math.rsqrt %13 : vector<16x1xf32>
    %15 = vector.broadcast %14 : vector<16x1xf32> to vector<16x32xf32>
    %16 = arith.mulf %6, %15 : vector<16x32xf32>
    %c0_5 = arith.constant 0 : index
    %c0_6 = arith.constant 0 : index
    %17 = vector.load %arg2[%c0_5, %c0_6] : memref<1x32xf32, #tpu.memory_space<vmem>>, vector<1x32xf32>
    %18 = vector.broadcast %17 : vector<1x32xf32> to vector<16x32xf32>
    %19 = arith.mulf %16, %18 : vector<16x32xf32>
    %c0_7 = arith.constant 0 : index
    %c0_8 = arith.constant 0 : index
    %20 = vector.load %arg3[%c0_7, %c0_8] : memref<1x32xf32, #tpu.memory_space<vmem>>, vector<1x32xf32>
    %21 = vector.broadcast %20 : vector<1x32xf32> to vector<16x32xf32>
    %22 = arith.addf %19, %21 : vector<16x32xf32>
    %23 = arith.truncf %22 : vector<16x32xf32> to vector<16x32xbf16>
    %c0_9 = arith.constant 0 : index
    %c0_10 = arith.constant 0 : index
    %24 = vector.load %arg4[%c0_9, %c0_10] : memref<16x32xbf16, #tpu.memory_space<vmem>>, vector<16x32xbf16>
    tpu.vector_store %arg4[%c0_9, %c0_10], %23 {strides = array<i32>} : memref<16x32xbf16, #tpu.memory_space<vmem>>, vector<16x32xbf16>,
    return
  }
  func.func @transform_0(%arg0: i32) -> (i32, i32) {
    %c0_i32 = arith.constant 0 : i32
    %c0_i32_0 = arith.constant 0 : i32
    return %arg0, %c0_i32 : i32, i32
  }
  func.func @transform_1(%arg0: i32) -> (i32, i32) {
    %c0_i32 = arith.constant 0 : i32
    %c0_i32_0 = arith.constant 0 : i32
    %c0_i32_1 = arith.constant 0 : i32
    return %c0_i32, %c0_i32_0 : i32, i32
  }
  func.func @transform_2(%arg0: i32) -> (i32, i32) {
    %c0_i32 = arith.constant 0 : i32
    %c0_i32_0 = arith.constant 0 : i32
    %c0_i32_1 = arith.constant 0 : i32
    return %c0_i32, %c0_i32_0 : i32, i32
  }
  func.func @transform_3(%arg0: i32) -> (i32, i32) {
    %c0_i32 = arith.constant 0 : i32
    %c0_i32_0 = arith.constant 0 : i32
    return %arg0, %c0_i32 : i32, i32
  }
}

module attributes {stable_mosaic.version = 11 : i64} {
  func.func @_attn_fused_kernel(%arg0: i32, %arg1: memref<1x8x96xbf16, #tpu.memory_space<vmem>>, %arg2: memref<1x8x32xbf16, #tpu.memory_space<vmem>>) attributes {dimension_semantics = [#tpu.dimension_semantics<parallel>], iteration_bounds = array<i64: 2>, scalar_prefetch = 0 : i64, scratch_operands = 0 : i64, tpu.core_type = #tpu.core_type<tc>, window_params = [{transform_indices = @transform_0, window_bounds = array<i64: 1, 8, 96>}, {transform_indices = @transform_1, window_bounds = array<i64: 1, 8, 32>}]} {
    %c0 = arith.constant 0 : index
    %c0_0 = arith.constant 0 : index
    %c0_1 = arith.constant 0 : index
    %0 = vector.load %arg1[%c0, %c0_0, %c0_1] : memref<1x8x96xbf16, #tpu.memory_space<vmem>>, vector<1x8x96xbf16>
    %1 = vector.shape_cast %0 : vector<1x8x96xbf16> to vector<8x96xbf16>
    %2 = vector.extract_strided_slice %1 {offsets = [0, 0], sizes = [8, 32], strides = [1, 1]} : vector<8x96xbf16> to vector<8x32xbf16>
    %3 = vector.extract_strided_slice %1 {offsets = [0, 32], sizes = [8, 32], strides = [1, 1]} : vector<8x96xbf16> to vector<8x32xbf16>
    %4 = vector.extract_strided_slice %1 {offsets = [0, 64], sizes = [8, 32], strides = [1, 1]} : vector<8x96xbf16> to vector<8x32xbf16>
    %5 = vector.extract_strided_slice %2 {offsets = [0, 0], sizes = [8, 8], strides = [1, 1]} : vector<8x32xbf16> to vector<8x8xbf16>
    %6 = vector.extract_strided_slice %3 {offsets = [0, 0], sizes = [8, 8], strides = [1, 1]} : vector<8x32xbf16> to vector<8x8xbf16>
    %7 = vector.extract_strided_slice %4 {offsets = [0, 0], sizes = [8, 8], strides = [1, 1]} : vector<8x32xbf16> to vector<8x8xbf16>
    %cst = arith.constant dense<0.000000e+00> : vector<8x8xf32>
    %8 = tpu.matmul %5, %6, %cst {dimension_numbers = #tpu.dot_dimension_numbers<[1], [1], [0], [0], [0, 0, 1, 0], [], []>} : vector<8x8xbf16>, vector<8x8xbf16>, vector<8x8xf32> -> vector<8x8xf32>
    %cst_2 = arith.constant dense<0xFF800000> : vector<8xf32>
    %9 = vector.multi_reduction <maximumf>, %8, %cst_2 [1] : vector<8x8xf32> to vector<8xf32>
    %10 = vector.shape_cast %9 : vector<8xf32> to vector<8x1xf32>
    %11 = vector.broadcast %10 : vector<8x1xf32> to vector<8x8xf32>
    %12 = arith.subf %8, %11 : vector<8x8xf32>
    %13 = math.exp %12 : vector<8x8xf32>
    %cst_3 = arith.constant dense<0.000000e+00> : vector<8xf32>
    %14 = vector.multi_reduction <add>, %13, %cst_3 [1] : vector<8x8xf32> to vector<8xf32>
    %15 = vector.shape_cast %14 : vector<8xf32> to vector<8x1xf32>
    %16 = tpu.reciprocal %15 {approx = true} : vector<8x1xf32> -> vector<8x1xf32>
    %17 = arith.truncf %13 : vector<8x8xf32> to vector<8x8xbf16>
    %cst_4 = arith.constant dense<0.000000e+00> : vector<8x8xf32>
    %18 = tpu.matmul %17, %7, %cst_4 {dimension_numbers = #tpu.dot_dimension_numbers<[1], [0], [0], [1], [0, 0, 1, 1], [], []>} : vector<8x8xbf16>, vector<8x8xbf16>, vector<8x8xf32> -> vector<8x8xf32>
    %19 = vector.broadcast %16 : vector<8x1xf32> to vector<8x8xf32>
    %20 = arith.mulf %18, %19 : vector<8x8xf32>
    %21 = vector.extract_strided_slice %2 {offsets = [0, 8], sizes = [8, 8], strides = [1, 1]} : vector<8x32xbf16> to vector<8x8xbf16>
    %22 = vector.extract_strided_slice %3 {offsets = [0, 8], sizes = [8, 8], strides = [1, 1]} : vector<8x32xbf16> to vector<8x8xbf16>
    %23 = vector.extract_strided_slice %4 {offsets = [0, 8], sizes = [8, 8], strides = [1, 1]} : vector<8x32xbf16> to vector<8x8xbf16>
    %cst_5 = arith.constant dense<0.000000e+00> : vector<8x8xf32>
    %24 = tpu.matmul %21, %22, %cst_5 {dimension_numbers = #tpu.dot_dimension_numbers<[1], [1], [0], [0], [0, 0, 1, 0], [], []>} : vector<8x8xbf16>, vector<8x8xbf16>, vector<8x8xf32> -> vector<8x8xf32>
    %cst_6 = arith.constant dense<0xFF800000> : vector<8xf32>
    %25 = vector.multi_reduction <maximumf>, %24, %cst_6 [1] : vector<8x8xf32> to vector<8xf32>
    %26 = vector.shape_cast %25 : vector<8xf32> to vector<8x1xf32>
    %27 = vector.broadcast %26 : vector<8x1xf32> to vector<8x8xf32>
    %28 = arith.subf %24, %27 : vector<8x8xf32>
    %29 = math.exp %28 : vector<8x8xf32>
    %cst_7 = arith.constant dense<0.000000e+00> : vector<8xf32>
    %30 = vector.multi_reduction <add>, %29, %cst_7 [1] : vector<8x8xf32> to vector<8xf32>
    %31 = vector.shape_cast %30 : vector<8xf32> to vector<8x1xf32>
    %32 = tpu.reciprocal %31 {approx = true} : vector<8x1xf32> -> vector<8x1xf32>
    %33 = arith.truncf %29 : vector<8x8xf32> to vector<8x8xbf16>
    %cst_8 = arith.constant dense<0.000000e+00> : vector<8x8xf32>
    %34 = tpu.matmul %33, %23, %cst_8 {dimension_numbers = #tpu.dot_dimension_numbers<[1], [0], [0], [1], [0, 0, 1, 1], [], []>} : vector<8x8xbf16>, vector<8x8xbf16>, vector<8x8xf32> -> vector<8x8xf32>
    %35 = vector.broadcast %32 : vector<8x1xf32> to vector<8x8xf32>
    %36 = arith.mulf %34, %35 : vector<8x8xf32>
    %37 = vector.extract_strided_slice %2 {offsets = [0, 16], sizes = [8, 8], strides = [1, 1]} : vector<8x32xbf16> to vector<8x8xbf16>
    %38 = vector.extract_strided_slice %3 {offsets = [0, 16], sizes = [8, 8], strides = [1, 1]} : vector<8x32xbf16> to vector<8x8xbf16>
    %39 = vector.extract_strided_slice %4 {offsets = [0, 16], sizes = [8, 8], strides = [1, 1]} : vector<8x32xbf16> to vector<8x8xbf16>
    %cst_9 = arith.constant dense<0.000000e+00> : vector<8x8xf32>
    %40 = tpu.matmul %37, %38, %cst_9 {dimension_numbers = #tpu.dot_dimension_numbers<[1], [1], [0], [0], [0, 0, 1, 0], [], []>} : vector<8x8xbf16>, vector<8x8xbf16>, vector<8x8xf32> -> vector<8x8xf32>
    %cst_10 = arith.constant dense<0xFF800000> : vector<8xf32>
    %41 = vector.multi_reduction <maximumf>, %40, %cst_10 [1] : vector<8x8xf32> to vector<8xf32>
    %42 = vector.shape_cast %41 : vector<8xf32> to vector<8x1xf32>
    %43 = vector.broadcast %42 : vector<8x1xf32> to vector<8x8xf32>
    %44 = arith.subf %40, %43 : vector<8x8xf32>
    %45 = math.exp %44 : vector<8x8xf32>
    %cst_11 = arith.constant dense<0.000000e+00> : vector<8xf32>
    %46 = vector.multi_reduction <add>, %45, %cst_11 [1] : vector<8x8xf32> to vector<8xf32>
    %47 = vector.shape_cast %46 : vector<8xf32> to vector<8x1xf32>
    %48 = tpu.reciprocal %47 {approx = true} : vector<8x1xf32> -> vector<8x1xf32>
    %49 = arith.truncf %45 : vector<8x8xf32> to vector<8x8xbf16>
    %cst_12 = arith.constant dense<0.000000e+00> : vector<8x8xf32>
    %50 = tpu.matmul %49, %39, %cst_12 {dimension_numbers = #tpu.dot_dimension_numbers<[1], [0], [0], [1], [0, 0, 1, 1], [], []>} : vector<8x8xbf16>, vector<8x8xbf16>, vector<8x8xf32> -> vector<8x8xf32>
    %51 = vector.broadcast %48 : vector<8x1xf32> to vector<8x8xf32>
    %52 = arith.mulf %50, %51 : vector<8x8xf32>
    %53 = vector.extract_strided_slice %2 {offsets = [0, 24], sizes = [8, 8], strides = [1, 1]} : vector<8x32xbf16> to vector<8x8xbf16>
    %54 = vector.extract_strided_slice %3 {offsets = [0, 24], sizes = [8, 8], strides = [1, 1]} : vector<8x32xbf16> to vector<8x8xbf16>
    %55 = vector.extract_strided_slice %4 {offsets = [0, 24], sizes = [8, 8], strides = [1, 1]} : vector<8x32xbf16> to vector<8x8xbf16>
    %cst_13 = arith.constant dense<0.000000e+00> : vector<8x8xf32>
    %56 = tpu.matmul %53, %54, %cst_13 {dimension_numbers = #tpu.dot_dimension_numbers<[1], [1], [0], [0], [0, 0, 1, 0], [], []>} : vector<8x8xbf16>, vector<8x8xbf16>, vector<8x8xf32> -> vector<8x8xf32>
    %cst_14 = arith.constant dense<0xFF800000> : vector<8xf32>
    %57 = vector.multi_reduction <maximumf>, %56, %cst_14 [1] : vector<8x8xf32> to vector<8xf32>
    %58 = vector.shape_cast %57 : vector<8xf32> to vector<8x1xf32>
    %59 = vector.broadcast %58 : vector<8x1xf32> to vector<8x8xf32>
    %60 = arith.subf %56, %59 : vector<8x8xf32>
    %61 = math.exp %60 : vector<8x8xf32>
    %cst_15 = arith.constant dense<0.000000e+00> : vector<8xf32>
    %62 = vector.multi_reduction <add>, %61, %cst_15 [1] : vector<8x8xf32> to vector<8xf32>
    %63 = vector.shape_cast %62 : vector<8xf32> to vector<8x1xf32>
    %64 = tpu.reciprocal %63 {approx = true} : vector<8x1xf32> -> vector<8x1xf32>
    %65 = arith.truncf %61 : vector<8x8xf32> to vector<8x8xbf16>
    %cst_16 = arith.constant dense<0.000000e+00> : vector<8x8xf32>
    %66 = tpu.matmul %65, %55, %cst_16 {dimension_numbers = #tpu.dot_dimension_numbers<[1], [0], [0], [1], [0, 0, 1, 1], [], []>} : vector<8x8xbf16>, vector<8x8xbf16>, vector<8x8xf32> -> vector<8x8xf32>
    %67 = vector.broadcast %64 : vector<8x1xf32> to vector<8x8xf32>
    %68 = arith.mulf %66, %67 : vector<8x8xf32>
    %69 = tpu.concatenate %20, %36, %52, %68 in 1 : vector<8x8xf32>, vector<8x8xf32>, vector<8x8xf32>, vector<8x8xf32> -> vector<8x32xf32>
    %70 = vector.shape_cast %69 : vector<8x32xf32> to vector<1x8x32xf32>
    %71 = arith.truncf %70 : vector<1x8x32xf32> to vector<1x8x32xbf16>
    %c0_17 = arith.constant 0 : index
    %c0_18 = arith.constant 0 : index
    %c0_19 = arith.constant 0 : index
    %72 = vector.load %arg2[%c0_17, %c0_18, %c0_19] : memref<1x8x32xbf16, #tpu.memory_space<vmem>>, vector<1x8x32xbf16>
    tpu.vector_store %arg2[%c0_17, %c0_18, %c0_19], %71 {strides = array<i32>} : memref<1x8x32xbf16, #tpu.memory_space<vmem>>, vector<1x8x32xbf16>,
    return
  }
  func.func @transform_0(%arg0: i32) -> (i32, i32, i32) {
    %c0_i32 = arith.constant 0 : i32
    %c0_i32_0 = arith.constant 0 : i32
    %c0_i32_1 = arith.constant 0 : i32
    return %arg0, %c0_i32, %c0_i32_0 : i32, i32, i32
  }
  func.func @transform_1(%arg0: i32) -> (i32, i32, i32) {
    %c0_i32 = arith.constant 0 : i32
    %c0_i32_0 = arith.constant 0 : i32
    %c0_i32_1 = arith.constant 0 : i32
    return %arg0, %c0_i32, %c0_i32_0 : i32, i32, i32
  }
}

module attributes {stable_mosaic.version = 11 : i64} {
  func.func @_linear_kernel(%arg0: i32, %arg1: i32, %arg2: i32, %arg3: memref<16x128xbf16, #tpu.memory_space<vmem>>, %arg4: memref<128x256xbf16, #tpu.memory_space<vmem>>, %arg5: memref<1x256xf32, #tpu.memory_space<vmem>>, %arg6: memref<16x256xbf16, #tpu.memory_space<vmem>>, %arg7: memref<16x256xf32, #tpu.memory_space<vmem>>) attributes {dimension_semantics = [#tpu.dimension_semantics<parallel>, #tpu.dimension_semantics<parallel>, #tpu.dimension_semantics<arbitrary>], iteration_bounds = array<i64: 1, 1, 1>, scalar_prefetch = 0 : i64, scratch_operands = 1 : i64, tpu.core_type = #tpu.core_type<tc>, window_params = [{transform_indices = @transform_0, window_bounds = array<i64: 16, 128>}, {transform_indices = @transform_1, window_bounds = array<i64: 128, 256>}, {transform_indices = @transform_2, window_bounds = array<i64: 1, 256>}, {transform_indices = @transform_3, window_bounds = array<i64: 16, 256>}]} {
    %c0_i32 = arith.constant 0 : i32
    %0 = arith.cmpi eq, %arg2, %c0_i32 : i32
    %1 = arith.extui %0 : i1 to i32
    %c0_i32_0 = arith.constant 0 : i32
    %2 = arith.cmpi ne, %1, %c0_i32_0 : i32
    scf.if %2 {
      %cst_10 = arith.constant 0.000000e+00 : f32
      %12 = vector.broadcast %cst_10 : f32 to vector<16x256xf32>
      %c0_11 = arith.constant 0 : index
      %c0_12 = arith.constant 0 : index
      %13 = vector.load %arg7[%c0_11, %c0_12] : memref<16x256xf32, #tpu.memory_space<vmem>>, vector<16x256xf32>
      tpu.vector_store %arg7[%c0_11, %c0_12], %12 {strides = array<i32>} : memref<16x256xf32, #tpu.memory_space<vmem>>, vector<16x256xf32>,
    } else {
    }
    %c0 = arith.constant 0 : index
    %c0_1 = arith.constant 0 : index
    %3 = vector.load %arg7[%c0, %c0_1] : memref<16x256xf32, #tpu.memory_space<vmem>>, vector<16x256xf32>
    %c0_2 = arith.constant 0 : index
    %c0_3 = arith.constant 0 : index
    %4 = vector.load %arg3[%c0_2, %c0_3] : memref<16x128xbf16, #tpu.memory_space<vmem>>, vector<16x128xbf16>
    %c0_4 = arith.constant 0 : index
    %c0_5 = arith.constant 0 : index
    %5 = vector.load %arg4[%c0_4, %c0_5] : memref<128x256xbf16, #tpu.memory_space<vmem>>, vector<128x256xbf16>
    %cst = arith.constant dense<0.000000e+00> : vector<16x256xf32>
    %6 = tpu.matmul %4, %5, %cst {dimension_numbers = #tpu.dot_dimension_numbers<[1], [0], [0], [1], [0, 0, 1, 1], [], []>} : vector<16x128xbf16>, vector<128x256xbf16>, vector<16x256xf32> -> vector<16x256xf32>
    %7 = arith.addf %3, %6 : vector<16x256xf32>
    %c0_6 = arith.constant 0 : index
    %c0_7 = arith.constant 0 : index
    %8 = vector.load %arg7[%c0_6, %c0_7] : memref<16x256xf32, #tpu.memory_space<vmem>>, vector<16x256xf32>
    tpu.vector_store %arg7[%c0_6, %c0_7], %7 {strides = array<i32>} : memref<16x256xf32, #tpu.memory_space<vmem>>, vector<16x256xf32>,
    %c0_i32_8 = arith.constant 0 : i32
    %9 = arith.cmpi eq, %arg2, %c0_i32_8 : i32
    %10 = arith.extui %9 : i1 to i32
    %c0_i32_9 = arith.constant 0 : i32
    %11 = arith.cmpi ne, %10, %c0_i32_9 : i32
    scf.if %11 {
      %c0_10 = arith.constant 0 : index
      %c0_11 = arith.constant 0 : index
      %12 = vector.load %arg7[%c0_10, %c0_11] : memref<16x256xf32, #tpu.memory_space<vmem>>, vector<16x256xf32>
      %c0_12 = arith.constant 0 : index
      %c0_13 = arith.constant 0 : index
      %13 = vector.load %arg5[%c0_12, %c0_13] : memref<1x256xf32, #tpu.memory_space<vmem>>, vector<1x256xf32>
      %14 = vector.broadcast %13 : vector<1x256xf32> to vector<16x256xf32>
      %15 = arith.addf %12, %14 : vector<16x256xf32>
      %16 = arith.truncf %15 : vector<16x256xf32> to vector<16x256xbf16>
      %c0_14 = arith.constant 0 : index
      %c0_15 = arith.constant 0 : index
      %17 = vector.load %arg6[%c0_14, %c0_15] : memref<16x256xbf16, #tpu.memory_space<vmem>>, vector<16x256xbf16>
      tpu.vector_store %arg6[%c0_14, %c0_15], %16 {strides = array<i32>} : memref<16x256xbf16, #tpu.memory_space<vmem>>, vector<16x256xbf16>,
    } else {
    }
    return
  }
  func.func @transform_0(%arg0: i32, %arg1: i32, %arg2: i32) -> (i32, i32) {
    %c0_i32 = arith.constant 0 : i32
    return %arg0, %arg2 : i32, i32
  }
  func.func @transform_1(%arg0: i32, %arg1: i32, %arg2: i32) -> (i32, i32) {
    %c0_i32 = arith.constant 0 : i32
    return %arg2, %arg1 : i32, i32
  }
  func.func @transform_2(%arg0: i32, %arg1: i32, %arg2: i32) -> (i32, i32) {
    %c0_i32 = arith.constant 0 : i32
    %c0_i32_0 = arith.constant 0 : i32
    return %c0_i32, %arg1 : i32, i32
  }
  func.func @transform_3(%arg0: i32, %arg1: i32, %arg2: i32) -> (i32, i32) {
    %c0_i32 = arith.constant 0 : i32
    return %arg0, %arg1 : i32, i32
  }
}

module attributes {stable_mosaic.version = 11 : i64} {
  func.func @_add_ln_kernel(%arg0: i32, %arg1: memref<16x32xbf16, #tpu.memory_space<vmem>>, %arg2: memref<16x32xbf16, #tpu.memory_space<vmem>>, %arg3: memref<1x32xf32, #tpu.memory_space<vmem>>, %arg4: memref<1x32xf32, #tpu.memory_space<vmem>>, %arg5: memref<16x32xbf16, #tpu.memory_space<vmem>>) attributes {dimension_semantics = [#tpu.dimension_semantics<parallel>], iteration_bounds = array<i64: 1>, scalar_prefetch = 0 : i64, scratch_operands = 0 : i64, tpu.core_type = #tpu.core_type<tc>, window_params = [{transform_indices = @transform_0, window_bounds = array<i64: 16, 32>}, {transform_indices = @transform_1, window_bounds = array<i64: 16, 32>}, {pipeline_mode = #tpu.pipeline_mode<synchronous>, transform_indices = @transform_2, window_bounds = array<i64: 1, 32>}, {pipeline_mode = #tpu.pipeline_mode<synchronous>, transform_indices = @transform_3, window_bounds = array<i64: 1, 32>}, {transform_indices = @transform_4, window_bounds = array<i64: 16, 32>}]} {
    %c0 = arith.constant 0 : index
    %c0_0 = arith.constant 0 : index
    %0 = vector.load %arg1[%c0, %c0_0] : memref<16x32xbf16, #tpu.memory_space<vmem>>, vector<16x32xbf16>
    %1 = arith.extf %0 : vector<16x32xbf16> to vector<16x32xf32>
    %c0_1 = arith.constant 0 : index
    %c0_2 = arith.constant 0 : index
    %2 = vector.load %arg2[%c0_1, %c0_2] : memref<16x32xbf16, #tpu.memory_space<vmem>>, vector<16x32xbf16>
    %3 = arith.extf %2 : vector<16x32xbf16> to vector<16x32xf32>
    %4 = arith.addf %1, %3 : vector<16x32xf32>
    %cst = arith.constant dense<0.000000e+00> : vector<16xf32>
    %5 = vector.multi_reduction <add>, %4, %cst [1] : vector<16x32xf32> to vector<16xf32>
    %6 = vector.shape_cast %5 : vector<16xf32> to vector<16x1xf32>
    %cst_3 = arith.constant 3.200000e+01 : f32
    %7 = vector.broadcast %cst_3 : f32 to vector<16x1xf32>
    %8 = arith.divf %6, %7 : vector<16x1xf32>
    %9 = vector.broadcast %8 : vector<16x1xf32> to vector<16x32xf32>
    %10 = arith.subf %4, %9 : vector<16x32xf32>
    %11 = arith.mulf %10, %10 : vector<16x32xf32>
    %cst_4 = arith.constant dense<0.000000e+00> : vector<16xf32>
    %12 = vector.multi_reduction <add>, %11, %cst_4 [1] : vector<16x32xf32> to vector<16xf32>
    %13 = vector.shape_cast %12 : vector<16xf32> to vector<16x1xf32>
    %cst_5 = arith.constant 3.200000e+01 : f32
    %14 = vector.broadcast %cst_5 : f32 to vector<16x1xf32>
    %15 = arith.divf %13, %14 : vector<16x1xf32>
    %cst_6 = arith.constant 9.99999974E-6 : f32
    %16 = vector.broadcast %cst_6 : f32 to vector<16x1xf32>
    %17 = arith.addf %15, %16 : vector<16x1xf32>
    %18 = math.rsqrt %17 : vector<16x1xf32>
    %19 = vector.broadcast %18 : vector<16x1xf32> to vector<16x32xf32>
    %20 = arith.mulf %10, %19 : vector<16x32xf32>
    %c0_7 = arith.constant 0 : index
    %c0_8 = arith.constant 0 : index
    %21 = vector.load %arg3[%c0_7, %c0_8] : memref<1x32xf32, #tpu.memory_space<vmem>>, vector<1x32xf32>
    %22 = vector.broadcast %21 : vector<1x32xf32> to vector<16x32xf32>
    %23 = arith.mulf %20, %22 : vector<16x32xf32>
    %c0_9 = arith.constant 0 : index
    %c0_10 = arith.constant 0 : index
    %24 = vector.load %arg4[%c0_9, %c0_10] : memref<1x32xf32, #tpu.memory_space<vmem>>, vector<1x32xf32>
    %25 = vector.broadcast %24 : vector<1x32xf32> to vector<16x32xf32>
    %26 = arith.addf %23, %25 : vector<16x32xf32>
    %27 = arith.truncf %26 : vector<16x32xf32> to vector<16x32xbf16>
    %c0_11 = arith.constant 0 : index
    %c0_12 = arith.constant 0 : index
    %28 = vector.load %arg5[%c0_11, %c0_12] : memref<16x32xbf16, #tpu.memory_space<vmem>>, vector<16x32xbf16>
    tpu.vector_store %arg5[%c0_11, %c0_12], %27 {strides = array<i32>} : memref<16x32xbf16, #tpu.memory_space<vmem>>, vector<16x32xbf16>,
    return
  }
  func.func @transform_0(%arg0: i32) -> (i32, i32) {
    %c0_i32 = arith.constant 0 : i32
    %c0_i32_0 = arith.constant 0 : i32
    return %arg0, %c0_i32 : i32, i32
  }
  func.func @transform_1(%arg0: i32) -> (i32, i32) {
    %c0_i32 = arith.constant 0 : i32
    %c0_i32_0 = arith.constant 0 : i32
    return %arg0, %c0_i32 : i32, i32
  }
  func.func @transform_2(%arg0: i32) -> (i32, i32) {
    %c0_i32 = arith.constant 0 : i32
    %c0_i32_0 = arith.constant 0 : i32
    %c0_i32_1 = arith.constant 0 : i32
    return %c0_i32, %c0_i32_0 : i32, i32
  }
  func.func @transform_3(%arg0: i32) -> (i32, i32) {
    %c0_i32 = arith.constant 0 : i32
    %c0_i32_0 = arith.constant 0 : i32
    %c0_i32_1 = arith.constant 0 : i32
    return %c0_i32, %c0_i32_0 : i32, i32
  }
  func.func @transform_4(%arg0: i32) -> (i32, i32) {
    %c0_i32 = arith.constant 0 : i32
    %c0_i32_0 = arith.constant 0 : i32
    return %arg0, %c0_i32 : i32, i32
  }
}

module attributes {stable_mosaic.version = 11 : i64} {
  func.func @_linear_kernel(%arg0: i32, %arg1: i32, %arg2: i32, %arg3: memref<16x128xbf16, #tpu.memory_space<vmem>>, %arg4: memref<128x256xbf16, #tpu.memory_space<vmem>>, %arg5: memref<1x256xf32, #tpu.memory_space<vmem>>, %arg6: memref<16x256xbf16, #tpu.memory_space<vmem>>, %arg7: memref<16x256xf32, #tpu.memory_space<vmem>>) attributes {dimension_semantics = [#tpu.dimension_semantics<parallel>, #tpu.dimension_semantics<parallel>, #tpu.dimension_semantics<arbitrary>], iteration_bounds = array<i64: 1, 1, 1>, scalar_prefetch = 0 : i64, scratch_operands = 1 : i64, tpu.core_type = #tpu.core_type<tc>, window_params = [{transform_indices = @transform_0, window_bounds = array<i64: 16, 128>}, {transform_indices = @transform_1, window_bounds = array<i64: 128, 256>}, {transform_indices = @transform_2, window_bounds = array<i64: 1, 256>}, {transform_indices = @transform_3, window_bounds = array<i64: 16, 256>}]} {
    %c0_i32 = arith.constant 0 : i32
    %0 = arith.cmpi eq, %arg2, %c0_i32 : i32
    %1 = arith.extui %0 : i1 to i32
    %c0_i32_0 = arith.constant 0 : i32
    %2 = arith.cmpi ne, %1, %c0_i32_0 : i32
    scf.if %2 {
      %cst_10 = arith.constant 0.000000e+00 : f32
      %12 = vector.broadcast %cst_10 : f32 to vector<16x256xf32>
      %c0_11 = arith.constant 0 : index
      %c0_12 = arith.constant 0 : index
      %13 = vector.load %arg7[%c0_11, %c0_12] : memref<16x256xf32, #tpu.memory_space<vmem>>, vector<16x256xf32>
      tpu.vector_store %arg7[%c0_11, %c0_12], %12 {strides = array<i32>} : memref<16x256xf32, #tpu.memory_space<vmem>>, vector<16x256xf32>,
    } else {
    }
    %c0 = arith.constant 0 : index
    %c0_1 = arith.constant 0 : index
    %3 = vector.load %arg7[%c0, %c0_1] : memref<16x256xf32, #tpu.memory_space<vmem>>, vector<16x256xf32>
    %c0_2 = arith.constant 0 : index
    %c0_3 = arith.constant 0 : index
    %4 = vector.load %arg3[%c0_2, %c0_3] : memref<16x128xbf16, #tpu.memory_space<vmem>>, vector<16x128xbf16>
    %c0_4 = arith.constant 0 : index
    %c0_5 = arith.constant 0 : index
    %5 = vector.load %arg4[%c0_4, %c0_5] : memref<128x256xbf16, #tpu.memory_space<vmem>>, vector<128x256xbf16>
    %cst = arith.constant dense<0.000000e+00> : vector<16x256xf32>
    %6 = tpu.matmul %4, %5, %cst {dimension_numbers = #tpu.dot_dimension_numbers<[1], [0], [0], [1], [0, 0, 1, 1], [], []>} : vector<16x128xbf16>, vector<128x256xbf16>, vector<16x256xf32> -> vector<16x256xf32>
    %7 = arith.addf %3, %6 : vector<16x256xf32>
    %c0_6 = arith.constant 0 : index
    %c0_7 = arith.constant 0 : index
    %8 = vector.load %arg7[%c0_6, %c0_7] : memref<16x256xf32, #tpu.memory_space<vmem>>, vector<16x256xf32>
    tpu.vector_store %arg7[%c0_6, %c0_7], %7 {strides = array<i32>} : memref<16x256xf32, #tpu.memory_space<vmem>>, vector<16x256xf32>,
    %c0_i32_8 = arith.constant 0 : i32
    %9 = arith.cmpi eq, %arg2, %c0_i32_8 : i32
    %10 = arith.extui %9 : i1 to i32
    %c0_i32_9 = arith.constant 0 : i32
    %11 = arith.cmpi ne, %10, %c0_i32_9 : i32
    scf.if %11 {
      %c0_10 = arith.constant 0 : index
      %c0_11 = arith.constant 0 : index
      %12 = vector.load %arg7[%c0_10, %c0_11] : memref<16x256xf32, #tpu.memory_space<vmem>>, vector<16x256xf32>
      %c0_12 = arith.constant 0 : index
      %c0_13 = arith.constant 0 : index
      %13 = vector.load %arg5[%c0_12, %c0_13] : memref<1x256xf32, #tpu.memory_space<vmem>>, vector<1x256xf32>
      %14 = vector.broadcast %13 : vector<1x256xf32> to vector<16x256xf32>
      %15 = arith.addf %12, %14 : vector<16x256xf32>
      %cst_14 = arith.constant 0.000000e+00 : f32
      %16 = vector.broadcast %cst_14 : f32 to vector<16x256xf32>
      %17 = arith.maximumf %15, %16 : vector<16x256xf32>
      %18 = arith.truncf %17 : vector<16x256xf32> to vector<16x256xbf16>
      %c0_15 = arith.constant 0 : index
      %c0_16 = arith.constant 0 : index
      %19 = vector.load %arg6[%c0_15, %c0_16] : memref<16x256xbf16, #tpu.memory_space<vmem>>, vector<16x256xbf16>
      tpu.vector_store %arg6[%c0_15, %c0_16], %18 {strides = array<i32>} : memref<16x256xbf16, #tpu.memory_space<vmem>>, vector<16x256xbf16>,
    } else {
    }
    return
  }
  func.func @transform_0(%arg0: i32, %arg1: i32, %arg2: i32) -> (i32, i32) {
    %c0_i32 = arith.constant 0 : i32
    return %arg0, %arg2 : i32, i32
  }
  func.func @transform_1(%arg0: i32, %arg1: i32, %arg2: i32) -> (i32, i32) {
    %c0_i32 = arith.constant 0 : i32
    return %arg2, %arg1 : i32, i32
  }
  func.func @transform_2(%arg0: i32, %arg1: i32, %arg2: i32) -> (i32, i32) {
    %c0_i32 = arith.constant 0 : i32
    %c0_i32_0 = arith.constant 0 : i32
    return %c0_i32, %arg1 : i32, i32
  }
  func.func @transform_3(%arg0: i32, %arg1: i32, %arg2: i32) -> (i32, i32) {
    %c0_i32 = arith.constant 0 : i32
    return %arg0, %arg1 : i32, i32
  }
}

module attributes {stable_mosaic.version = 11 : i64} {
  func.func @_linear_kernel(%arg0: i32, %arg1: i32, %arg2: i32, %arg3: memref<16x128xbf16, #tpu.memory_space<vmem>>, %arg4: memref<128x256xbf16, #tpu.memory_space<vmem>>, %arg5: memref<1x256xf32, #tpu.memory_space<vmem>>, %arg6: memref<16x256xbf16, #tpu.memory_space<vmem>>, %arg7: memref<16x256xf32, #tpu.memory_space<vmem>>) attributes {dimension_semantics = [#tpu.dimension_semantics<parallel>, #tpu.dimension_semantics<parallel>, #tpu.dimension_semantics<arbitrary>], iteration_bounds = array<i64: 1, 1, 1>, scalar_prefetch = 0 : i64, scratch_operands = 1 : i64, tpu.core_type = #tpu.core_type<tc>, window_params = [{transform_indices = @transform_0, window_bounds = array<i64: 16, 128>}, {transform_indices = @transform_1, window_bounds = array<i64: 128, 256>}, {transform_indices = @transform_2, window_bounds = array<i64: 1, 256>}, {transform_indices = @transform_3, window_bounds = array<i64: 16, 256>}]} {
    %c0_i32 = arith.constant 0 : i32
    %0 = arith.cmpi eq, %arg2, %c0_i32 : i32
    %1 = arith.extui %0 : i1 to i32
    %c0_i32_0 = arith.constant 0 : i32
    %2 = arith.cmpi ne, %1, %c0_i32_0 : i32
    scf.if %2 {
      %cst_10 = arith.constant 0.000000e+00 : f32
      %12 = vector.broadcast %cst_10 : f32 to vector<16x256xf32>
      %c0_11 = arith.constant 0 : index
      %c0_12 = arith.constant 0 : index
      %13 = vector.load %arg7[%c0_11, %c0_12] : memref<16x256xf32, #tpu.memory_space<vmem>>, vector<16x256xf32>
      tpu.vector_store %arg7[%c0_11, %c0_12], %12 {strides = array<i32>} : memref<16x256xf32, #tpu.memory_space<vmem>>, vector<16x256xf32>,
    } else {
    }
    %c0 = arith.constant 0 : index
    %c0_1 = arith.constant 0 : index
    %3 = vector.load %arg7[%c0, %c0_1] : memref<16x256xf32, #tpu.memory_space<vmem>>, vector<16x256xf32>
    %c0_2 = arith.constant 0 : index
    %c0_3 = arith.constant 0 : index
    %4 = vector.load %arg3[%c0_2, %c0_3] : memref<16x128xbf16, #tpu.memory_space<vmem>>, vector<16x128xbf16>
    %c0_4 = arith.constant 0 : index
    %c0_5 = arith.constant 0 : index
    %5 = vector.load %arg4[%c0_4, %c0_5] : memref<128x256xbf16, #tpu.memory_space<vmem>>, vector<128x256xbf16>
    %cst = arith.constant dense<0.000000e+00> : vector<16x256xf32>
    %6 = tpu.matmul %4, %5, %cst {dimension_numbers = #tpu.dot_dimension_numbers<[1], [0], [0], [1], [0, 0, 1, 1], [], []>} : vector<16x128xbf16>, vector<128x256xbf16>, vector<16x256xf32> -> vector<16x256xf32>
    %7 = arith.addf %3, %6 : vector<16x256xf32>
    %c0_6 = arith.constant 0 : index
    %c0_7 = arith.constant 0 : index
    %8 = vector.load %arg7[%c0_6, %c0_7] : memref<16x256xf32, #tpu.memory_space<vmem>>, vector<16x256xf32>
    tpu.vector_store %arg7[%c0_6, %c0_7], %7 {strides = array<i32>} : memref<16x256xf32, #tpu.memory_space<vmem>>, vector<16x256xf32>,
    %c0_i32_8 = arith.constant 0 : i32
    %9 = arith.cmpi eq, %arg2, %c0_i32_8 : i32
    %10 = arith.extui %9 : i1 to i32
    %c0_i32_9 = arith.constant 0 : i32
    %11 = arith.cmpi ne, %10, %c0_i32_9 : i32
    scf.if %11 {
      %c0_10 = arith.constant 0 : index
      %c0_11 = arith.constant 0 : index
      %12 = vector.load %arg7[%c0_10, %c0_11] : memref<16x256xf32, #tpu.memory_space<vmem>>, vector<16x256xf32>
      %c0_12 = arith.constant 0 : index
      %c0_13 = arith.constant 0 : index
      %13 = vector.load %arg5[%c0_12, %c0_13] : memref<1x256xf32, #tpu.memory_space<vmem>>, vector<1x256xf32>
      %14 = vector.broadcast %13 : vector<1x256xf32> to vector<16x256xf32>
      %15 = arith.addf %12, %14 : vector<16x256xf32>
      %cst_14 = arith.constant 5.000000e-01 : f32
      %16 = vector.broadcast %cst_14 : f32 to vector<16x256xf32>
      %17 = arith.mulf %15, %16 : vector<16x256xf32>
      %cst_15 = arith.constant 1.41421354 : f32
      %18 = vector.broadcast %cst_15 : f32 to vector<16x256xf32>
      %19 = arith.divf %15, %18 : vector<16x256xf32>
      %20 = math.erf %19 : vector<16x256xf32>
      %cst_16 = arith.constant 1.000000e+00 : f32
      %21 = vector.broadcast %cst_16 : f32 to vector<16x256xf32>
      %22 = arith.addf %21, %20 : vector<16x256xf32>
      %23 = arith.mulf %17, %22 : vector<16x256xf32>
      %24 = arith.truncf %23 : vector<16x256xf32> to vector<16x256xbf16>
      %c0_17 = arith.constant 0 : index
      %c0_18 = arith.constant 0 : index
      %25 = vector.load %arg6[%c0_17, %c0_18] : memref<16x256xbf16, #tpu.memory_space<vmem>>, vector<16x256xbf16>
      tpu.vector_store %arg6[%c0_17, %c0_18], %24 {strides = array<i32>} : memref<16x256xbf16, #tpu.memory_space<vmem>>, vector<16x256xbf16>,
    } else {
    }
    return
  }
  func.func @transform_0(%arg0: i32, %arg1: i32, %arg2: i32) -> (i32, i32) {
    %c0_i32 = arith.constant 0 : i32
    return %arg0, %arg2 : i32, i32
  }
  func.func @transform_1(%arg0: i32, %arg1: i32, %arg2: i32) -> (i32, i32) {
    %c0_i32 = arith.constant 0 : i32
    return %arg2, %arg1 : i32, i32
  }
  func.func @transform_2(%arg0: i32, %arg1: i32, %arg2: i32) -> (i32, i32) {
    %c0_i32 = arith.constant 0 : i32
    %c0_i32_0 = arith.constant 0 : i32
    return %c0_i32, %arg1 : i32, i32
  }
  func.func @transform_3(%arg0: i32, %arg1: i32, %arg2: i32) -> (i32, i32) {
    %c0_i32 = arith.constant 0 : i32
    return %arg0, %arg1 : i32, i32
  }
}

module attributes {stable_mosaic.version = 11 : i64} {
  func.func @_ln_kernel(%arg0: i32, %arg1: memref<8x32xbf16, #tpu.memory_space<vmem>>, %arg2: memref<1x32xf32, #tpu.memory_space<vmem>>, %arg3: memref<1x32xf32, #tpu.memory_space<vmem>>, %arg4: memref<8x32xbf16, #tpu.memory_space<vmem>>) attributes {dimension_semantics = [#tpu.dimension_semantics<parallel>], iteration_bounds = array<i64: 1>, scalar_prefetch = 0 : i64, scratch_operands = 0 : i64, tpu.core_type = #tpu.core_type<tc>, window_params = [{transform_indices = @transform_0, window_bounds = array<i64: 8, 32>}, {pipeline_mode = #tpu.pipeline_mode<synchronous>, transform_indices = @transform_1, window_bounds = array<i64: 1, 32>}, {pipeline_mode = #tpu.pipeline_mode<synchronous>, transform_indices = @transform_2, window_bounds = array<i64: 1, 32>}, {transform_indices = @transform_3, window_bounds = array<i64: 8, 32>}]} {
    %c0 = arith.constant 0 : index
    %c0_0 = arith.constant 0 : index
    %0 = vector.load %arg1[%c0, %c0_0] : memref<8x32xbf16, #tpu.memory_space<vmem>>, vector<8x32xbf16>
    %1 = arith.extf %0 : vector<8x32xbf16> to vector<8x32xf32>
    %cst = arith.constant dense<0.000000e+00> : vector<8xf32>
    %2 = vector.multi_reduction <add>, %1, %cst [1] : vector<8x32xf32> to vector<8xf32>
    %3 = vector.shape_cast %2 : vector<8xf32> to vector<8x1xf32>
    %cst_1 = arith.constant 3.200000e+01 : f32
    %4 = vector.broadcast %cst_1 : f32 to vector<8x1xf32>
    %5 = arith.divf %3, %4 : vector<8x1xf32>
    %6 = vector.broadcast %5 : vector<8x1xf32> to vector<8x32xf32>
    %7 = arith.subf %1, %6 : vector<8x32xf32>
    %8 = arith.mulf %7, %7 : vector<8x32xf32>
    %cst_2 = arith.constant dense<0.000000e+00> : vector<8xf32>
    %9 = vector.multi_reduction <add>, %8, %cst_2 [1] : vector<8x32xf32> to vector<8xf32>
    %10 = vector.shape_cast %9 : vector<8xf32> to vector<8x1xf32>
    %cst_3 = arith.constant 3.200000e+01 : f32
    %11 = vector.broadcast %cst_3 : f32 to vector<8x1xf32>
    %12 = arith.divf %10, %11 : vector<8x1xf32>
    %cst_4 = arith.constant 9.99999974E-6 : f32
    %13 = vector.broadcast %cst_4 : f32 to vector<8x1xf32>
    %14 = arith.addf %12, %13 : vector<8x1xf32>
    %15 = math.rsqrt %14 : vector<8x1xf32>
    %16 = vector.broadcast %15 : vector<8x1xf32> to vector<8x32xf32>
    %17 = arith.mulf %7, %16 : vector<8x32xf32>
    %c0_5 = arith.constant 0 : index
    %c0_6 = arith.constant 0 : index
    %18 = vector.load %arg2[%c0_5, %c0_6] : memref<1x32xf32, #tpu.memory_space<vmem>>, vector<1x32xf32>
    %19 = vector.broadcast %18 : vector<1x32xf32> to vector<8x32xf32>
    %20 = arith.mulf %17, %19 : vector<8x32xf32>
    %c0_7 = arith.constant 0 : index
    %c0_8 = arith.constant 0 : index
    %21 = vector.load %arg3[%c0_7, %c0_8] : memref<1x32xf32, #tpu.memory_space<vmem>>, vector<1x32xf32>
    %22 = vector.broadcast %21 : vector<1x32xf32> to vector<8x32xf32>
    %23 = arith.addf %20, %22 : vector<8x32xf32>
    %24 = arith.truncf %23 : vector<8x32xf32> to vector<8x32xbf16>
    %c0_9 = arith.constant 0 : index
    %c0_10 = arith.constant 0 : index
    %25 = vector.load %arg4[%c0_9, %c0_10] : memref<8x32xbf16, #tpu.memory_space<vmem>>, vector<8x32xbf16>
    tpu.vector_store %arg4[%c0_9, %c0_10], %24 {strides = array<i32>} : memref<8x32xbf16, #tpu.memory_space<vmem>>, vector<8x32xbf16>,
    return
  }
  func.func @transform_0(%arg0: i32) -> (i32, i32) {
    %c0_i32 = arith.constant 0 : i32
    %c0_i32_0 = arith.constant 0 : i32
    return %arg0, %c0_i32 : i32, i32
  }
  func.func @transform_1(%arg0: i32) -> (i32, i32) {
    %c0_i32 = arith.constant 0 : i32
    %c0_i32_0 = arith.constant 0 : i32
    %c0_i32_1 = arith.constant 0 : i32
    return %c0_i32, %c0_i32_0 : i32, i32
  }
  func.func @transform_2(%arg0: i32) -> (i32, i32) {
    %c0_i32 = arith.constant 0 : i32
    %c0_i32_0 = arith.constant 0 : i32
    %c0_i32_1 = arith.constant 0 : i32
    return %c0_i32, %c0_i32_0 : i32, i32
  }
  func.func @transform_3(%arg0: i32) -> (i32, i32) {
    %c0_i32 = arith.constant 0 : i32
    %c0_i32_0 = arith.constant 0 : i32
    return %arg0, %c0_i32 : i32, i32
  }
}

module attributes {stable_mosaic.version = 11 : i64} {
  func.func @_linear_kernel(%arg0: i32, %arg1: i32, %arg2: i32, %arg3: memref<16x128xbf16, #tpu.memory_space<vmem>>, %arg4: memref<128x256xbf16, #tpu.memory_space<vmem>>, %arg5: memref<1x256xf32, #tpu.memory_space<vmem>>, %arg6: memref<16x256xf32, #tpu.memory_space<vmem>>, %arg7: memref<16x256xf32, #tpu.memory_space<vmem>>) attributes {dimension_semantics = [#tpu.dimension_semantics<parallel>, #tpu.dimension_semantics<parallel>, #tpu.dimension_semantics<arbitrary>], iteration_bounds = array<i64: 1, 1, 1>, scalar_prefetch = 0 : i64, scratch_operands = 1 : i64, tpu.core_type = #tpu.core_type<tc>, window_params = [{transform_indices = @transform_0, window_bounds = array<i64: 16, 128>}, {transform_indices = @transform_1, window_bounds = array<i64: 128, 256>}, {transform_indices = @transform_2, window_bounds = array<i64: 1, 256>}, {transform_indices = @transform_3, window_bounds = array<i64: 16, 256>}]} {
    %c0_i32 = arith.constant 0 : i32
    %0 = arith.cmpi eq, %arg2, %c0_i32 : i32
    %1 = arith.extui %0 : i1 to i32
    %c0_i32_0 = arith.constant 0 : i32
    %2 = arith.cmpi ne, %1, %c0_i32_0 : i32
    scf.if %2 {
      %cst_10 = arith.constant 0.000000e+00 : f32
      %12 = vector.broadcast %cst_10 : f32 to vector<16x256xf32>
      %c0_11 = arith.constant 0 : index
      %c0_12 = arith.constant 0 : index
      %13 = vector.load %arg7[%c0_11, %c0_12] : memref<16x256xf32, #tpu.memory_space<vmem>>, vector<16x256xf32>
      tpu.vector_store %arg7[%c0_11, %c0_12], %12 {strides = array<i32>} : memref<16x256xf32, #tpu.memory_space<vmem>>, vector<16x256xf32>,
    } else {
    }
    %c0 = arith.constant 0 : index
    %c0_1 = arith.constant 0 : index
    %3 = vector.load %arg7[%c0, %c0_1] : memref<16x256xf32, #tpu.memory_space<vmem>>, vector<16x256xf32>
    %c0_2 = arith.constant 0 : index
    %c0_3 = arith.constant 0 : index
    %4 = vector.load %arg3[%c0_2, %c0_3] : memref<16x128xbf16, #tpu.memory_space<vmem>>, vector<16x128xbf16>
    %c0_4 = arith.constant 0 : index
    %c0_5 = arith.constant 0 : index
    %5 = vector.load %arg4[%c0_4, %c0_5] : memref<128x256xbf16, #tpu.memory_space<vmem>>, vector<128x256xbf16>
    %cst = arith.constant dense<0.000000e+00> : vector<16x256xf32>
    %6 = tpu.matmul %4, %5, %cst {dimension_numbers = #tpu.dot_dimension_numbers<[1], [0], [0], [1], [0, 0, 1, 1], [], []>} : vector<16x128xbf16>, vector<128x256xbf16>, vector<16x256xf32> -> vector<16x256xf32>
    %7 = arith.addf %3, %6 : vector<16x256xf32>
    %c0_6 = arith.constant 0 : index
    %c0_7 = arith.constant 0 : index
    %8 = vector.load %arg7[%c0_6, %c0_7] : memref<16x256xf32, #tpu.memory_space<vmem>>, vector<16x256xf32>
    tpu.vector_store %arg7[%c0_6, %c0_7], %7 {strides = array<i32>} : memref<16x256xf32, #tpu.memory_space<vmem>>, vector<16x256xf32>,
    %c0_i32_8 = arith.constant 0 : i32
    %9 = arith.cmpi eq, %arg2, %c0_i32_8 : i32
    %10 = arith.extui %9 : i1 to i32
    %c0_i32_9 = arith.constant 0 : i32
    %11 = arith.cmpi ne, %10, %c0_i32_9 : i32
    scf.if %11 {
      %c0_10 = arith.constant 0 : index
      %c0_11 = arith.constant 0 : index
      %12 = vector.load %arg7[%c0_10, %c0_11] : memref<16x256xf32, #tpu.memory_space<vmem>>, vector<16x256xf32>
      %c0_12 = arith.constant 0 : index
      %c0_13 = arith.constant 0 : index
      %13 = vector.load %arg5[%c0_12, %c0_13] : memref<1x256xf32, #tpu.memory_space<vmem>>, vector<1x256xf32>
      %14 = vector.broadcast %13 : vector<1x256xf32> to vector<16x256xf32>
      %15 = arith.addf %12, %14 : vector<16x256xf32>
      %c0_14 = arith.constant 0 : index
      %c0_15 = arith.constant 0 : index
      %16 = vector.load %arg6[%c0_14, %c0_15] : memref<16x256xf32, #tpu.memory_space<vmem>>, vector<16x256xf32>
      tpu.vector_store %arg6[%c0_14, %c0_15], %15 {strides = array<i32>} : memref<16x256xf32, #tpu.memory_space<vmem>>, vector<16x256xf32>,
    } else {
    }
    return
  }
  func.func @transform_0(%arg0: i32, %arg1: i32, %arg2: i32) -> (i32, i32) {
    %c0_i32 = arith.constant 0 : i32
    return %arg0, %arg2 : i32, i32
  }
  func.func @transform_1(%arg0: i32, %arg1: i32, %arg2: i32) -> (i32, i32) {
    %c0_i32 = arith.constant 0 : i32
    return %arg2, %arg1 : i32, i32
  }
  func.func @transform_2(%arg0: i32, %arg1: i32, %arg2: i32) -> (i32, i32) {
    %c0_i32 = arith.constant 0 : i32
    %c0_i32_0 = arith.constant 0 : i32
    return %c0_i32, %arg1 : i32, i32
  }
  func.func @transform_3(%arg0: i32, %arg1: i32, %arg2: i32) -> (i32, i32) {
    %c0_i32 = arith.constant 0 : i32
    return %arg0, %arg1 : i32, i32
  }
}

module attributes {stable_mosaic.version = 11 : i64} {
  func.func @_linear_kernel(%arg0: i32, %arg1: i32, %arg2: i32, %arg3: memref<16x128xbf16, #tpu.memory_space<vmem>>, %arg4: memref<128x256xbf16, #tpu.memory_space<vmem>>, %arg5: memref<1x256xf32, #tpu.memory_space<vmem>>, %arg6: memref<16x256xbf16, #tpu.memory_space<vmem>>, %arg7: memref<16x256xf32, #tpu.memory_space<vmem>>) attributes {dimension_semantics = [#tpu.dimension_semantics<parallel>, #tpu.dimension_semantics<parallel>, #tpu.dimension_semantics<arbitrary>], iteration_bounds = array<i64: 1, 1, 1>, scalar_prefetch = 0 : i64, scratch_operands = 1 : i64, tpu.core_type = #tpu.core_type<tc>, window_params = [{transform_indices = @transform_0, window_bounds = array<i64: 16, 128>}, {transform_indices = @transform_1, window_bounds = array<i64: 128, 256>}, {transform_indices = @transform_2, window_bounds = array<i64: 1, 256>}, {transform_indices = @transform_3, window_bounds = array<i64: 16, 256>}]} {
    %c0_i32 = arith.constant 0 : i32
    %0 = arith.cmpi eq, %arg2, %c0_i32 : i32
    %1 = arith.extui %0 : i1 to i32
    %c0_i32_0 = arith.constant 0 : i32
    %2 = arith.cmpi ne, %1, %c0_i32_0 : i32
    scf.if %2 {
      %cst_10 = arith.constant 0.000000e+00 : f32
      %12 = vector.broadcast %cst_10 : f32 to vector<16x256xf32>
      %c0_11 = arith.constant 0 : index
      %c0_12 = arith.constant 0 : index
      %13 = vector.load %arg7[%c0_11, %c0_12] : memref<16x256xf32, #tpu.memory_space<vmem>>, vector<16x256xf32>
      tpu.vector_store %arg7[%c0_11, %c0_12], %12 {strides = array<i32>} : memref<16x256xf32, #tpu.memory_space<vmem>>, vector<16x256xf32>,
    } else {
    }
    %c0 = arith.constant 0 : index
    %c0_1 = arith.constant 0 : index
    %3 = vector.load %arg7[%c0, %c0_1] : memref<16x256xf32, #tpu.memory_space<vmem>>, vector<16x256xf32>
    %c0_2 = arith.constant 0 : index
    %c0_3 = arith.constant 0 : index
    %4 = vector.load %arg3[%c0_2, %c0_3] : memref<16x128xbf16, #tpu.memory_space<vmem>>, vector<16x128xbf16>
    %c0_4 = arith.constant 0 : index
    %c0_5 = arith.constant 0 : index
    %5 = vector.load %arg4[%c0_4, %c0_5] : memref<128x256xbf16, #tpu.memory_space<vmem>>, vector<128x256xbf16>
    %cst = arith.constant dense<0.000000e+00> : vector<16x256xf32>
    %6 = tpu.matmul %4, %5, %cst {dimension_numbers = #tpu.dot_dimension_numbers<[1], [0], [0], [1], [0, 0, 1, 1], [], []>} : vector<16x128xbf16>, vector<128x256xbf16>, vector<16x256xf32> -> vector<16x256xf32>
    %7 = arith.addf %3, %6 : vector<16x256xf32>
    %c0_6 = arith.constant 0 : index
    %c0_7 = arith.constant 0 : index
    %8 = vector.load %arg7[%c0_6, %c0_7] : memref<16x256xf32, #tpu.memory_space<vmem>>, vector<16x256xf32>
    tpu.vector_store %arg7[%c0_6, %c0_7], %7 {strides = array<i32>} : memref<16x256xf32, #tpu.memory_space<vmem>>, vector<16x256xf32>,
    %c0_i32_8 = arith.constant 0 : i32
    %9 = arith.cmpi eq, %arg2, %c0_i32_8 : i32
    %10 = arith.extui %9 : i1 to i32
    %c0_i32_9 = arith.constant 0 : i32
    %11 = arith.cmpi ne, %10, %c0_i32_9 : i32
    scf.if %11 {
      %c0_10 = arith.constant 0 : index
      %c0_11 = arith.constant 0 : index
      %12 = vector.load %arg7[%c0_10, %c0_11] : memref<16x256xf32, #tpu.memory_space<vmem>>, vector<16x256xf32>
      %c0_12 = arith.constant 0 : index
      %c0_13 = arith.constant 0 : index
      %13 = vector.load %arg5[%c0_12, %c0_13] : memref<1x256xf32, #tpu.memory_space<vmem>>, vector<1x256xf32>
      %14 = vector.broadcast %13 : vector<1x256xf32> to vector<16x256xf32>
      %15 = arith.addf %12, %14 : vector<16x256xf32>
      %16 = math.tanh %15 : vector<16x256xf32>
      %17 = arith.truncf %16 : vector<16x256xf32> to vector<16x256xbf16>
      %c0_14 = arith.constant 0 : index
      %c0_15 = arith.constant 0 : index
      %18 = vector.load %arg6[%c0_14, %c0_15] : memref<16x256xbf16, #tpu.memory_space<vmem>>, vector<16x256xbf16>
      tpu.vector_store %arg6[%c0_14, %c0_15], %17 {strides = array<i32>} : memref<16x256xbf16, #tpu.memory_space<vmem>>, vector<16x256xbf16>,
    } else {
    }
    return
  }
  func.func @transform_0(%arg0: i32, %arg1: i32, %arg2: i32) -> (i32, i32) {
    %c0_i32 = arith.constant 0 : i32
    return %arg0, %arg2 : i32, i32
  }
  func.func @transform_1(%arg0: i32, %arg1: i32, %arg2: i32) -> (i32, i32) {
    %c0_i32 = arith.constant 0 : i32
    return %arg2, %arg1 : i32, i32
  }
  func.func @transform_2(%arg0: i32, %arg1: i32, %arg2: i32) -> (i32, i32) {
    %c0_i32 = arith.constant 0 : i32
    %c0_i32_0 = arith.constant 0 : i32
    return %c0_i32, %arg1 : i32, i32
  }
  func.func @transform_3(%arg0: i32, %arg1: i32, %arg2: i32) -> (i32, i32) {
    %c0_i32 = arith.constant 0 : i32
    return %arg0, %arg1 : i32, i32
  }
}

</mosaic_0001>

<llo_original>
// kernel: bert_forward.24
$region0: #{bert_forward.24}
  #allocation0 [shape = 'u32[]', space=smem, size = 0x4, offset = 0x4, fixed_abs, tag = 'smem constant byte address 0x4 - core index']
  #allocation1 [shape = 'u32[144,128]{1,0:T(1,128)}', space=vmem, size = 0x12000, scoped, tag = 'internal scratch']
  %s0 = inlined_call_operand.vmem [shape: bf16[16,32], index: 0, kind: input, shape index: {}]
  %s1 = inlined_call_operand.vmem [shape: bf16[16,32], index: 1, kind: input, shape index: {}]
  %s2 = inlined_call_operand.vmem [shape: f32[1,32], index: 2, kind: input, shape index: {}]
  %s3 = inlined_call_operand.vmem [shape: f32[1,32], index: 3, kind: input, shape index: {}]
  %s4 = inlined_call_operand.vmem [shape: bf16[16,32], index: 4, kind: output, shape index: {}]
  %s5 = sld [smem:[#allocation0]]
  $region26: #{bert_forward.24} parent=0
    _
  %s7 = ssub.s32 1, %s5
  %s8 = scalar_select 0, %s7, %s5
  // Predicated region
  $region2: #{bert_forward.24} parent=0 // pred_check
    _
  $region3: #{bert_forward.24} parent=0 // pred_check_branch
    %10 = sbr.rel (0) target = $region5
  $region4: #{bert_forward.24} parent=0 // pred_region
    _
  $region5: #{bert_forward.24} parent=0 // pred_fallthru
    _
  // Predicated region
  $region6: #{bert_forward.24} parent=0 // pred_check
    _
  $region7: #{bert_forward.24} parent=0 // pred_check_branch
    %12 = sbr.rel (0) target = $region9
  $region8: #{bert_forward.24} parent=0 // pred_region
    _
  $region9: #{bert_forward.24} parent=0 // pred_fallthru
    _
  // Predicated region
  $region10: #{bert_forward.24} parent=0 // pred_check
    _
  $region11: #{bert_forward.24} parent=0 // pred_check_branch
    %14 = sbr.rel (0) target = $region13
  $region12: #{bert_forward.24} parent=0 // pred_region
    _
  $region13: #{bert_forward.24} parent=0 // pred_fallthru
    _
  // Predicated region
  $region14: #{bert_forward.24} parent=0 // pred_check
    _
  $region15: #{bert_forward.24} parent=0 // pred_check_branch
    %16 = sbr.rel (0) target = $region17
  $region16: #{bert_forward.24} parent=0 // pred_region
    _
  $region17: #{bert_forward.24} parent=0 // pred_fallthru
    _
  %v17 = vld [vmem:[%s0] sm:$0xf]
  %v18 = vld [vmem:[%s0 + $0x4] sm:$0xf]
  %v19 = vunpack.c.l.bf16 %v17
  %v20 = vunpack.c.l.bf16 %v18
  %v21 = vld [vmem:[%s1] sm:$0xf]
  %v22 = vld [vmem:[%s1 + $0x4] sm:$0xf]
  %v23 = vunpack.c.l.bf16 %v21
  %v24 = vunpack.c.l.bf16 %v22
  %v25 = vadd.f32 %v19, %v23
  %v26 = vadd.f32 %v20, %v24
  %vm27 = vcmask 261120
  %v28 = vsel %vm27, %v25, 0.0
  %29 = vadd.xlane.f32.xlu0 %v28
  %v30 = vpop.xlane.xlu0 %29
  %v31 = vsel %vm27, %v26, 0.0
  %32 = vadd.xlane.f32.xlu0 %v31
  %v33 = vpop.xlane.xlu0 %32
  %v34 = vrcp.pop 32.0
  %v35 = vmul.f32 %v30, %v34
  %v36 = vmul.f32 %v33, %v34
  %v37 = vsub.f32 %v25, %v35
  %v38 = vsub.f32 %v26, %v36
  %v39 = vmul.f32 %v37, %v37
  %v40 = vmul.f32 %v38, %v38
  %v41 = vsel %vm27, %v39, 0.0
  %42 = vadd.xlane.f32.xlu0 %v41
  %v43 = vpop.xlane.xlu0 %42
  %v44 = vsel %vm27, %v40, 0.0
  %45 = vadd.xlane.f32.xlu0 %v44
  %v46 = vpop.xlane.xlu0 %45
  %v47 = vmul.f32 %v43, %v34
  %v48 = vmul.f32 %v46, %v34
  %v49 = vadd.f32 %v47, 1e-05
  %v50 = vadd.f32 %v48, 1e-05
  %v51 = vrsqrt.pop %v49
  %v52 = vrsqrt.pop %v50
  %v53 = vmul.f32 %v37, %v51
  %v54 = vmul.f32 %v38, %v52
  %v55 = vld [vmem:[%s2] sm:$0x1]
  %v57 = vlaneseq
  %v58 = vshrl.u32 %v57, 7
  %v59 = vsub.s32 0, %v58
  %v60 = vrot.slane %v55, %v59
  %v62 = vmul.f32 %v53, %v60
  %v63 = vmul.f32 %v54, %v60
  %v64 = vld [vmem:[%s3] sm:$0x1]
  %v66 = vlaneseq
  %v67 = vshrl.u32 %v66, 7
  %v68 = vsub.s32 0, %v67
  %v69 = vrot.slane %v64, %v68
  %v71 = vadd.f32 %v62, %v69
  %v72 = vadd.f32 %v63, %v69
  %v73 = vpack.c.bf16 %v72, %v71
  %v75 = vunpack.c.l.b16 %v73
  %v76 = vunpack.c.h.b16 %v73
  %v77 = vpack.c.b16 %v75, %v75
  %v78 = vpack.c.b16 %v76, %v76
  %vm81 = vcmask 257024
  %82 = vst.msk [vmem:[%s4] sm:$0xf] %vm81, %v77
  %83 = vst.msk [vmem:[%s4 + $0x4] sm:$0xf] %vm81, %v78
  // Predicated region
  $region18: #{bert_forward.24} parent=0 // pred_check
    _
  $region19: #{bert_forward.24} parent=0 // pred_check_branch
    %85 = sbr.rel (0) target = $region21
  $region20: #{bert_forward.24} parent=0 // pred_region
    _
  $region21: #{bert_forward.24} parent=0 // pred_fallthru
    _
  // Predicated region
  $region22: #{bert_forward.24} parent=0 // pred_check
    _
  $region23: #{bert_forward.24} parent=0 // pred_check_branch
    %87 = sbr.rel (0) target = $region25
  $region24: #{bert_forward.24} parent=0 // pred_region
    _
  $region25: #{bert_forward.24} parent=0 // pred_fallthru
    _

// kernel: bert_forward.20
$region0: #{bert_forward.20}
  #allocation0 [shape = 'u32[]', space=smem, size = 0x4, offset = 0x4, fixed_abs, tag = 'smem constant byte address 0x4 - core index']
  #allocation1 [shape = 'u32[144,128]{1,0:T(1,128)}', space=vmem, size = 0x12000, scoped, tag = 'internal scratch']
  %s0 = inlined_call_operand.vmem [shape: f32[16,32], index: 0, kind: input, shape index: {}]
  %s1 = inlined_call_operand.vmem [shape: f32[1,32], index: 1, kind: input, shape index: {}]
  %s2 = inlined_call_operand.vmem [shape: f32[1,32], index: 2, kind: input, shape index: {}]
  %s3 = inlined_call_operand.vmem [shape: bf16[16,32], index: 3, kind: output, shape index: {}]
  %s4 = sld [smem:[#allocation0]]
  $region22: #{bert_forward.20} parent=0
    _
  %s6 = ssub.s32 1, %s4
  %s7 = scalar_select 0, %s6, %s4
  // Predicated region
  $region2: #{bert_forward.20} parent=0 // pred_check
    _
  $region3: #{bert_forward.20} parent=0 // pred_check_branch
    %9 = sbr.rel (0) target = $region5
  $region4: #{bert_forward.20} parent=0 // pred_region
    _
  $region5: #{bert_forward.20} parent=0 // pred_fallthru
    _
  // Predicated region
  $region6: #{bert_forward.20} parent=0 // pred_check
    _
  $region7: #{bert_forward.20} parent=0 // pred_check_branch
    %11 = sbr.rel (0) target = $region9
  $region8: #{bert_forward.20} parent=0 // pred_region
    _
  $region9: #{bert_forward.20} parent=0 // pred_fallthru
    _
  // Predicated region
  $region10: #{bert_forward.20} parent=0 // pred_check
    _
  $region11: #{bert_forward.20} parent=0 // pred_check_branch
    %13 = sbr.rel (0) target = $region13
  $region12: #{bert_forward.20} parent=0 // pred_region
    _
  $region13: #{bert_forward.20} parent=0 // pred_fallthru
    _
  %v14 = vld [vmem:[%s0] sm:$0xff]
  %v15 = vld [vmem:[%s0 + $0x8] sm:$0xff]
  %vm16 = vcmask 261120
  %v17 = vsel %vm16, %v14, 0.0
  %18 = vadd.xlane.f32.xlu0 %v17
  %v19 = vpop.xlane.xlu0 %18
  %v20 = vsel %vm16, %v15, 0.0
  %21 = vadd.xlane.f32.xlu0 %v20
  %v22 = vpop.xlane.xlu0 %21
  %v23 = vrcp.pop 32.0
  %v24 = vmul.f32 %v19, %v23
  %v25 = vmul.f32 %v22, %v23
  %v26 = vsub.f32 %v14, %v24
  %v27 = vsub.f32 %v15, %v25
  %v28 = vmul.f32 %v26, %v26
  %v29 = vmul.f32 %v27, %v27
  %v30 = vsel %vm16, %v28, 0.0
  %31 = vadd.xlane.f32.xlu0 %v30
  %v32 = vpop.xlane.xlu0 %31
  %v33 = vsel %vm16, %v29, 0.0
  %34 = vadd.xlane.f32.xlu0 %v33
  %v35 = vpop.xlane.xlu0 %34
  %v36 = vmul.f32 %v32, %v23
  %v37 = vmul.f32 %v35, %v23
  %v38 = vadd.f32 %v36, 1e-05
  %v39 = vadd.f32 %v37, 1e-05
  %v40 = vrsqrt.pop %v38
  %v41 = vrsqrt.pop %v39
  %v42 = vmul.f32 %v26, %v40
  %v43 = vmul.f32 %v27, %v41
  %v44 = vld [vmem:[%s1] sm:$0x1]
  %v46 = vlaneseq
  %v47 = vshrl.u32 %v46, 7
  %v48 = vsub.s32 0, %v47
  %v49 = vrot.slane %v44, %v48
  %v51 = vmul.f32 %v42, %v49
  %v52 = vmul.f32 %v43, %v49
  %v53 = vld [vmem:[%s2] sm:$0x1]
  %v55 = vlaneseq
  %v56 = vshrl.u32 %v55, 7
  %v57 = vsub.s32 0, %v56
  %v58 = vrot.slane %v53, %v57
  %v60 = vadd.f32 %v51, %v58
  %v61 = vadd.f32 %v52, %v58
  %v62 = vpack.c.bf16 %v61, %v60
  %v64 = vunpack.c.l.b16 %v62
  %v65 = vunpack.c.h.b16 %v62
  %v66 = vpack.c.b16 %v64, %v64
  %v67 = vpack.c.b16 %v65, %v65
  %vm70 = vcmask 257024
  %71 = vst.msk [vmem:[%s3] sm:$0xf] %vm70, %v66
  %72 = vst.msk [vmem:[%s3 + $0x4] sm:$0xf] %vm70, %v67
  // Predicated region
  $region14: #{bert_forward.20} parent=0 // pred_check
    _
  $region15: #{bert_forward.20} parent=0 // pred_check_branch
    %74 = sbr.rel (0) target = $region17
  $region16: #{bert_forward.20} parent=0 // pred_region
    _
  $region17: #{bert_forward.20} parent=0 // pred_fallthru
    _
  // Predicated region
  $region18: #{bert_forward.20} parent=0 // pred_check
    _
  $region19: #{bert_forward.20} parent=0 // pred_check_branch
    %76 = sbr.rel (0) target = $region21
  $region20: #{bert_forward.20} parent=0 // pred_region
    _
  $region21: #{bert_forward.20} parent=0 // pred_fallthru
    _

// kernel: bert_forward.21
$region0: #{bert_forward.21}
  #allocation0 [shape = 'u32[]', space=smem, size = 0x4, offset = 0x4, fixed_abs, tag = 'smem constant byte address 0x4 - core index']
  #allocation1 [shape = 'u32[144,128]{1,0:T(1,128)}', space=vmem, size = 0x12000, scoped, tag = 'internal scratch']
  #allocation2 [shape = 'f32[16,256]{1,0:T(8,128)}', space=vmem, size = 0x4000, scoped, tag = 'scratch operand']
  %s0 = inlined_call_operand.vmem [shape: bf16[16,128], index: 0, kind: input, shape index: {}]
  %s1 = inlined_call_operand.vmem [shape: bf16[128,256], index: 1, kind: input, shape index: {}]
  %s2 = inlined_call_operand.vmem [shape: f32[1,256], index: 2, kind: input, shape index: {}]
  %s3 = inlined_call_operand.vmem [shape: bf16[16,256], index: 3, kind: output, shape index: {}]
  %s4 = sld [smem:[#allocation0]]
  $region30: #{bert_forward.21} parent=0
    _
  %s6 = ssub.s32 1, %s4
  %s7 = scalar_select 0, %s6, %s4
  // Predicated region
  $region2: #{bert_forward.21} parent=0 // pred_check
    _
  $region3: #{bert_forward.21} parent=0 // pred_check_branch
    %9 = sbr.rel (0) target = $region5
  $region4: #{bert_forward.21} parent=0 // pred_region
    _
  $region5: #{bert_forward.21} parent=0 // pred_fallthru
    _
  // Predicated region
  $region6: #{bert_forward.21} parent=0 // pred_check
    _
  $region7: #{bert_forward.21} parent=0 // pred_check_branch
    %11 = sbr.rel (0) target = $region9
  $region8: #{bert_forward.21} parent=0 // pred_region
    _
  $region9: #{bert_forward.21} parent=0 // pred_fallthru
    _
  // Predicated region
  $region10: #{bert_forward.21} parent=0 // pred_check
    _
  $region11: #{bert_forward.21} parent=0 // pred_check_branch
    %13 = sbr.rel (0) target = $region13
  $region12: #{bert_forward.21} parent=0 // pred_region
    _
  $region13: #{bert_forward.21} parent=0 // pred_fallthru
    _
  %p15 = scmp.eq.s32.totalorder 0, 0
  // Predicated region
  $region14: #{bert_forward.21} parent=0 // pred_check
    %p16 = pneg %p15
  $region15: #{bert_forward.21} parent=0 // pred_check_branch
    %18 = sbr.rel (%p16) target = $region17
  $region16: #{bert_forward.21} parent=0 // pred_region
    %19 = vst [vmem:[#allocation2] sm:$0xff] 0.0
    %20 = vst [vmem:[#allocation2 + $0x8] sm:$0xff] 0.0
    %21 = vst [vmem:[#allocation2 + $0x10] sm:$0xff] 0.0
    %22 = vst [vmem:[#allocation2 + $0x18] sm:$0xff] 0.0
  $region17: #{bert_forward.21} parent=0 // pred_fallthru
    _
  %v23 = vld [vmem:[#allocation2] sm:$0xff]
  %v24 = vld [vmem:[#allocation2 + $0x8] sm:$0xff]
  %v25 = vld [vmem:[#allocation2 + $0x10] sm:$0xff]
  %v26 = vld [vmem:[#allocation2 + $0x18] sm:$0xff]
  %v27 = vld [vmem:[%s0] sm:$0xf]
  %v28 = vld [vmem:[%s0 + $0x4] sm:$0xf]
  %v29 = vld [vmem:[%s1] sm:$0xff]
  %v30 = vld [vmem:[%s1 + $0x8] sm:$0xff]
  %v31 = vld [vmem:[%s1 + $0x10] sm:$0xff]
  %v32 = vld [vmem:[%s1 + $0x18] sm:$0xff]
  %v33 = vld [vmem:[%s1 + $0x20] sm:$0xff]
  %v34 = vld [vmem:[%s1 + $0x28] sm:$0xff]
  %v35 = vld [vmem:[%s1 + $0x30] sm:$0xff]
  %v36 = vld [vmem:[%s1 + $0x38] sm:$0xff]
  %v37 = vld [vmem:[%s1 + $0x40] sm:$0xff]
  %v38 = vld [vmem:[%s1 + $0x48] sm:$0xff]
  %v39 = vld [vmem:[%s1 + $0x50] sm:$0xff]
  %v40 = vld [vmem:[%s1 + $0x58] sm:$0xff]
  %v41 = vld [vmem:[%s1 + $0x60] sm:$0xff]
  %v42 = vld [vmem:[%s1 + $0x68] sm:$0xff]
  %v43 = vld [vmem:[%s1 + $0x70] sm:$0xff]
  %v44 = vld [vmem:[%s1 + $0x78] sm:$0xff]
  %v47 = vunpack.c.l.b16 %v27
  %v48 = vunpack.c.l.b16 %v28
  %v49 = vpack.c.b16 %v48, %v47
  %v67 = vunpack.c.l.b16 %v29
  %v68 = vunpack.c.h.b16 %v29
  %v69 = vunpack.c.l.b16 %v30
  %v70 = vunpack.c.h.b16 %v30
  %v71 = vunpack.c.l.b16 %v31
  %v72 = vunpack.c.h.b16 %v31
  %v73 = vunpack.c.l.b16 %v32
  %v74 = vunpack.c.h.b16 %v32
  %v75 = vunpack.c.l.b16 %v33
  %v76 = vunpack.c.h.b16 %v33
  %v77 = vunpack.c.l.b16 %v34
  %v78 = vunpack.c.h.b16 %v34
  %v79 = vunpack.c.l.b16 %v35
  %v80 = vunpack.c.h.b16 %v35
  %v81 = vunpack.c.l.b16 %v36
  %v82 = vunpack.c.h.b16 %v36
  %v83 = vunpack.c.l.b16 %v37
  %v84 = vunpack.c.h.b16 %v37
  %v85 = vunpack.c.l.b16 %v38
  %v86 = vunpack.c.h.b16 %v38
  %v87 = vunpack.c.l.b16 %v39
  %v88 = vunpack.c.h.b16 %v39
  %v89 = vunpack.c.l.b16 %v40
  %v90 = vunpack.c.h.b16 %v40
  %v91 = vunpack.c.l.b16 %v41
  %v92 = vunpack.c.h.b16 %v41
  %v93 = vunpack.c.l.b16 %v42
  %v94 = vunpack.c.h.b16 %v42
  %v95 = vunpack.c.l.b16 %v43
  %v96 = vunpack.c.h.b16 %v43
  %v97 = vunpack.c.l.b16 %v44
  %v98 = vunpack.c.h.b16 %v44
  %v99 = vpack.c.b16 %v69, %v67
  %v100 = vpack.c.b16 %v70, %v68
  %v101 = vpack.c.b16 %v73, %v71
  %v102 = vpack.c.b16 %v74, %v72
  %v103 = vpack.c.b16 %v77, %v75
  %v104 = vpack.c.b16 %v78, %v76
  %v105 = vpack.c.b16 %v81, %v79
  %v106 = vpack.c.b16 %v82, %v80
  %v107 = vpack.c.b16 %v85, %v83
  %v108 = vpack.c.b16 %v86, %v84
  %v109 = vpack.c.b16 %v89, %v87
  %v110 = vpack.c.b16 %v90, %v88
  %v111 = vpack.c.b16 %v93, %v91
  %v112 = vpack.c.b16 %v94, %v92
  %v113 = vpack.c.b16 %v97, %v95
  %v114 = vpack.c.b16 %v98, %v96
  %131 = vmatprep.subr.bf16.mxu0 %v100
  %132 = vmatpush1.bf16.msra.mxu0 %v99
  %133 = vmatprep.subr.bf16.mxu0 %v102
  %134 = vmatpush1.bf16.msra.mxu0 %v101
  %135 = vmatprep.subr.bf16.mxu0 %v104
  %136 = vmatpush1.bf16.msra.mxu0 %v103
  %137 = vmatprep.subr.bf16.mxu0 %v106
  %138 = vmatpush1.bf16.msra.mxu0 %v105
  %139 = vmatprep.subr.bf16.mxu0 %v108
  %140 = vmatpush1.bf16.msra.mxu0 %v107
  %141 = vmatprep.subr.bf16.mxu0 %v110
  %142 = vmatpush1.bf16.msra.mxu0 %v109
  %143 = vmatprep.subr.bf16.mxu0 %v112
  %144 = vmatpush1.bf16.msra.mxu0 %v111
  %145 = vmatprep.subr.bf16.mxu0 %v114
  %146 = vmatpush1.bf16.msra.mxu0 %v113
  %147 = vmatprep.subr.bf16.mxu0 0
  %148 = vmatpush1.bf16.msra.mxu0 0
  %149 = vmatprep.subr.bf16.mxu0 0
  %150 = vmatpush1.bf16.msra.mxu0 0
  %151 = vmatprep.subr.bf16.mxu0 0
  %152 = vmatpush1.bf16.msra.mxu0 0
  %153 = vmatprep.subr.bf16.mxu0 0
  %154 = vmatpush1.bf16.msra.mxu0 0
  %155 = vmatprep.subr.bf16.mxu0 0
  %156 = vmatpush1.bf16.msra.mxu0 0
  %157 = vmatprep.subr.bf16.mxu0 0
  %158 = vmatpush1.bf16.msra.mxu0 0
  %159 = vmatprep.subr.bf16.mxu0 0
  %160 = vmatpush1.bf16.msra.mxu0 0
  %161 = vmatprep.subr.bf16.mxu0 0
  %162 = vmatpush1.bf16.msra.mxu0 0
  %163 = vmatprep.mubr.bf16.mxu0 0
  %164 = vmatmul.mubr.bf16.gmra.mrb[0].mxu0 %v49
  %v165 = vpop.f32.mrb[0].mxu0
  %v166 = vadd.f32 0.0, %v165
  %v167 = vpop.f32.mrb[0].mxu0
  %v168 = vadd.f32 0.0, %v167
  %v169 = vpop.f32.mrb[0].mxu0
  %v170 = vadd.f32 0.0, %v169
  %v171 = vpop.f32.mrb[0].mxu0
  %v172 = vadd.f32 0.0, %v171
  %173 = vdwg.mxu0
  %v174 = vadd.f32 %v23, %v166
  %v175 = vadd.f32 %v24, %v168
  %v176 = vadd.f32 %v25, %v170
  %v177 = vadd.f32 %v26, %v172
  %178 = vst [vmem:[#allocation2] sm:$0xff] %v174
  %179 = vst [vmem:[#allocation2 + $0x8] sm:$0xff] %v175
  %180 = vst [vmem:[#allocation2 + $0x10] sm:$0xff] %v176
  %181 = vst [vmem:[#allocation2 + $0x18] sm:$0xff] %v177
  // Predicated region
  $region18: #{bert_forward.21} parent=0 // pred_check
    %p182 = pneg %p15
  $region19: #{bert_forward.21} parent=0 // pred_check_branch
    %184 = sbr.rel (%p182) target = $region21
  $region20: #{bert_forward.21} parent=0 // pred_region
    %v185 = vld [vmem:[#allocation2] sm:$0xff]
    %v186 = vld [vmem:[#allocation2 + $0x8] sm:$0xff]
    %v187 = vld [vmem:[#allocation2 + $0x10] sm:$0xff]
    %v188 = vld [vmem:[#allocation2 + $0x18] sm:$0xff]
    %v189 = vld [vmem:[%s2] sm:$0x3]
    %v191 = vlaneseq
    %v192 = vshrl.u32 %v191, 7
    %v193 = vsub.s32 0, %v192
    %v194 = vrot.slane %v189, %v193
    %v195 = vlaneseq
    %v196 = vshrl.u32 %v195, 7
    %v197 = vsub.s32 1, %v196
    %v198 = vrot.slane %v189, %v197
    %v201 = vadd.f32 %v185, %v194
    %v202 = vadd.f32 %v186, %v198
    %v203 = vadd.f32 %v187, %v194
    %v204 = vadd.f32 %v188, %v198
    %v205 = vpack.c.bf16 %v203, %v201
    %v206 = vpack.c.bf16 %v204, %v202
    %v209 = vunpack.c.l.b16 %v205
    %v210 = vunpack.c.l.b16 %v206
    %v211 = vunpack.c.h.b16 %v205
    %v212 = vunpack.c.h.b16 %v206
    %v213 = vpack.c.b16 %v210, %v209
    %v214 = vpack.c.b16 %v212, %v211
    %217 = vst [vmem:[%s3] sm:$0xff] %v213
    %218 = vst [vmem:[%s3 + $0x8] sm:$0xff] %v214
  $region21: #{bert_forward.21} parent=0 // pred_fallthru
    _
  // Predicated region
  $region22: #{bert_forward.21} parent=0 // pred_check
    _
  $region23: #{bert_forward.21} parent=0 // pred_check_branch
    %220 = sbr.rel (0) target = $region25
  $region24: #{bert_forward.21} parent=0 // pred_region
    _
  $region25: #{bert_forward.21} parent=0 // pred_fallthru
    _
  // Predicated region
  $region26: #{bert_forward.21} parent=0 // pred_check
    _
  $region27: #{bert_forward.21} parent=0 // pred_check_branch
    %222 = sbr.rel (0) target = $region29
  $region28: #{bert_forward.21} parent=0 // pred_region
    _
  $region29: #{bert_forward.21} parent=0 // pred_fallthru
    _

// kernel: bert_forward.22
$region0: #{bert_forward.22}
  #allocation0 [shape = 'u32[]', space=smem, size = 0x4, offset = 0x4, fixed_abs, tag = 'smem constant byte address 0x4 - core index']
  #allocation1 [shape = 'u32[144,128]{1,0:T(1,128)}', space=vmem, size = 0x12000, scoped, tag = 'internal scratch']
  %s0 = inlined_call_operand.vmem [shape: bf16[2,8,96], index: 0, kind: input, shape index: {}]
  %s1 = inlined_call_operand.vmem [shape: bf16[2,8,32], index: 1, kind: output, shape index: {}]
  %s2 = sld [smem:[#allocation0]]
  $region37: #{bert_forward.22} parent=0
    _
  %s4 = ssub.s32 1, %s2
  %s5 = scalar_select 0, %s4, %s2
  loop: start=0, step=1, limit=4
  $region2: #{bert_forward.22} parent=0 // loop_pre_header
    _
  $region3: #{bert_forward.22} parent=0 // loop_header
    %s7 = sphi 0, %s11
    %p8 = scmp.ge.s32.totalorder %s7, 4
    %s17 = sphi 0, %s19
    %s20 = sphi 0, %s17
    %s21 = sphi 0, %s20
    %s37 = sphi 0, %s21
    %s43 = sphi 0, %s45
    %s46 = sphi 0, %s43
    %s47 = sphi 0, %s46
    %s63 = sphi 0, %s47
  $region4: #{bert_forward.22} parent=0 // loop_header_branch
    %10 = sbr.rel (%p8) target = $region8
  $region5: #{bert_forward.22} parent=0 // loop_body
    %s12 = ssub.s32 %s7, 1
    %s13 = ssub.s32 %s7, 2
    %s14 = sadd.s32 %s7, 1
    %s15 = ssub.s32 %s7, %s14
    %p16 = scmp.eq.s32.totalorder %s15, 0
    %s18 = sadd.s32 %s17, 1
    %s19 = scalar_select %p16, %s17, %s18
    %p22 = pneg %p16
    %p23 = scmp.eq.s32.totalorder %s7, 1
    %p24 = por %p22, %p23
    %p25 = scmp.ne.s32.totalorder %s17, %s20
    %p26 = scmp.eq.s32.totalorder %s7, 0
    %p27 = por %p25, %p26
    %p28 = scmp.ne.s32.totalorder %s17, %s20
    %p29 = scmp.eq.s32.totalorder %s12, 1
    %p30 = por %p28, %p29
    %p31 = scmp.ne.s32.totalorder %s20, %s21
    %p32 = scmp.eq.s32.totalorder %s12, 0
    %p33 = por %p31, %p32
    %p34 = scmp.ne.s32.totalorder %s20, %s21
    %p35 = scmp.eq.s32.totalorder %s13, 1
    %p36 = por %p34, %p35
    %p38 = scmp.ne.s32.totalorder %s21, %s37
    %p39 = scmp.eq.s32.totalorder %s13, 0
    %p40 = por %p38, %p39
    %s41 = ssub.s32 %s7, %s14
    %p42 = scmp.eq.s32.totalorder %s41, 0
    %s44 = sadd.s32 %s43, 1
    %s45 = scalar_select %p42, %s43, %s44
    %p48 = pneg %p42
    %p49 = scmp.eq.s32.totalorder %s7, 1
    %p50 = por %p48, %p49
    %p51 = scmp.ne.s32.totalorder %s43, %s46
    %p52 = scmp.eq.s32.totalorder %s7, 0
    %p53 = por %p51, %p52
    %p54 = scmp.ne.s32.totalorder %s43, %s46
    %p55 = scmp.eq.s32.totalorder %s12, 1
    %p56 = por %p54, %p55
    %p57 = scmp.ne.s32.totalorder %s46, %s47
    %p58 = scmp.eq.s32.totalorder %s12, 0
    %p59 = por %p57, %p58
    %p60 = scmp.ne.s32.totalorder %s46, %s47
    %p61 = scmp.eq.s32.totalorder %s13, 1
    %p62 = por %p60, %p61
    %p64 = scmp.ne.s32.totalorder %s47, %s63
    %p65 = scmp.eq.s32.totalorder %s13, 0
    %p66 = por %p64, %p65
    %p67 = scmp.le.s32.totalorder 1, %s7
    %p68 = scmp.lt.s32.totalorder %s7, 3
    %p69 = pnand %p67, %p68
    %p70 = pneg %p69
    // Predicated region
    $region9: #{bert_forward.22} parent=5 // pred_check
      _
    $region10: #{bert_forward.22} parent=5 // pred_check_branch
      %72 = sbr.rel (%p69) target = $region12
    $region11: #{bert_forward.22} parent=5 // pred_region
      %s73 = ssub.s32 %s7, 1
    $region12: #{bert_forward.22} parent=5 // pred_fallthru
      _
    %p74 = scmp.lt.s32.totalorder %s7, 2
    // Predicated region
    $region13: #{bert_forward.22} parent=5 // pred_check
      %p75 = pneg %p74
    $region14: #{bert_forward.22} parent=5 // pred_check_branch
      %77 = sbr.rel (%p75) target = $region16
    $region15: #{bert_forward.22} parent=5 // pred_region
      // Predicated region
      $region17: #{bert_forward.22} parent=15 // pred_check
        %p78 = pneg %p27
      $region18: #{bert_forward.22} parent=15 // pred_check_branch
        %80 = sbr.rel (%p78) target = $region20
      $region19: #{bert_forward.22} parent=15 // pred_region
        %p81 = scmp.lt.s32.totalorder %s7, 1
        %s82 = scalar_select %p81, %s7, 1
        %s83 = smul.addr %s82, 4
        %s84 = scalar_lea.vmem %s0, %s83
      $region20: #{bert_forward.22} parent=15 // pred_fallthru
        _
    $region16: #{bert_forward.22} parent=5 // pred_fallthru
      _
    %p85 = scmp.le.s32.totalorder 1, %s7
    %p86 = scmp.lt.s32.totalorder %s7, 3
    %p87 = pnand %p85, %p86
    %p88 = pneg %p87
    // Predicated region
    $region21: #{bert_forward.22} parent=5 // pred_check
      _
    $region22: #{bert_forward.22} parent=5 // pred_check_branch
      %90 = sbr.rel (%p87) target = $region24
    $region23: #{bert_forward.22} parent=5 // pred_region
      %s91 = ssub.s32 %s7, 1
      %p92 = scmp.lt.s32.totalorder %s12, 1
      %s93 = scalar_select %p92, %s12, 1
      %s94 = smul.addr %s93, 4
      %s95 = scalar_lea.vmem %s0, %s94
      %p96 = pneg %p33
      %p97 = pneg %p30
      %p98 = pneg %p59
      %p99 = pneg %p56
      %p100 = scmp.lt.s32.totalorder %s12, 1
      %s101 = scalar_select %p100, %s12, 1
      %s102 = smul.addr %s101, 4
      %s103 = scalar_lea.vmem %s1, %s102
      %p104 = scmp.lt.s32.totalorder %s12, 1
      %s105 = scalar_select %p104, %s12, 1
      %s106 = smul.addr %s105, 4
      %s107 = scalar_lea.vmem %s0, %s106
      %p108 = scmp.lt.s32.totalorder %s12, 1
      %s109 = scalar_select %p108, %s12, 1
      %s110 = smul.addr %s109, 4
      %s111 = scalar_lea.vmem %s1, %s110
      %v113 = vld [vmem:[%s107] sm:$0xf]
      %v115 = vunpack.c.l.b16 %v113
      %v116 = vpack.c.b16 %v115, %v115
      %117 = vrot.lane.b32.xlu0 %v116, 96
      %v118 = vpop.permute.xlu0 %117
      %vm119 = vcmask 64512
      %v121 = vsel %vm119, %v113, 0
      %v124 = vsel %vm119, %v118, 0
      %126 = vmatprep.subr.bf16.mxu0 0
      %127 = vmatpush1.bf16.xpose.msra.mxu0 %v124
      %128 = vmatprep.subr.bf16.mxu0 0
      %129 = vmatpush1.bf16.xpose.msra.mxu0 0
      %130 = vmatprep.subr.bf16.mxu0 0
      %131 = vmatpush1.bf16.xpose.msra.mxu0 0
      %132 = vmatprep.subr.bf16.mxu0 0
      %133 = vmatpush1.bf16.xpose.msra.mxu0 0
      %134 = vmatprep.subr.bf16.mxu0 0
      %135 = vmatpush1.bf16.xpose.msra.mxu0 0
      %136 = vmatprep.subr.bf16.mxu0 0
      %137 = vmatpush1.bf16.xpose.msra.mxu0 0
      %138 = vmatprep.subr.bf16.mxu0 0
      %139 = vmatpush1.bf16.xpose.msra.mxu0 0
      %140 = vmatprep.subr.bf16.mxu0 0
      %141 = vmatpush1.bf16.xpose.msra.mxu0 0
      %142 = vmatprep.subr.bf16.mxu0 0
      %143 = vmatpush1.bf16.xpose.msra.mxu0 0
      %144 = vmatprep.subr.bf16.mxu0 0
      %145 = vmatpush1.bf16.xpose.msra.mxu0 0
      %146 = vmatprep.subr.bf16.mxu0 0
      %147 = vmatpush1.bf16.xpose.msra.mxu0 0
      %148 = vmatprep.subr.bf16.mxu0 0
      %149 = vmatpush1.bf16.xpose.msra.mxu0 0
      %150 = vmatprep.subr.bf16.mxu0 0
      %151 = vmatpush1.bf16.xpose.msra.mxu0 0
      %152 = vmatprep.subr.bf16.mxu0 0
      %153 = vmatpush1.bf16.xpose.msra.mxu0 0
      %154 = vmatprep.subr.bf16.mxu0 0
      %155 = vmatpush1.bf16.xpose.msra.mxu0 0
      %156 = vmatprep.subr.bf16.mxu0 0
      %157 = vmatpush1.bf16.xpose.msra.mxu0 0
      %158 = vmatprep.mubr.bf16.mxu0 0
      %159 = vmatmul.mubr.bf16.gmra.mrb[0].mxu0 %v121
      %v160 = vpop.f32.mrb[0].mxu0
      %v161 = vadd.f32 0.0, %v160
      %v162 = vpop.f32.mrb[0].mxu0
      %v163 = vpop.f32.mrb[0].mxu0
      %v164 = vpop.f32.mrb[0].mxu0
      %165 = vdwg.mxu0
      %v166 = vsel %vm119, %v161, -inf
      %167 = vmax.xlane.f32.xlu0 %v166
      %v168 = vpop.xlane.xlu0 %167
      %v169 = vsub.f32 %v161, %v168
      %v170 = vmul.f32 %v169, 1.442695
      %v171 = vpow.pop %v170
      %v172 = vsel %vm119, %v171, 0.0
      %173 = vadd.xlane.f32.xlu0 %v172
      %v174 = vpop.xlane.xlu0 %173
      %v175 = vrcp.pop %v174
      %v176 = vpack.c.bf16 %v171, %v171
      %177 = vrot.lane.b32.xlu0 %v116, 64
      %v178 = vpop.permute.xlu0 %177
      %v180 = vsel %vm119, %v176, 0
      %vm182 = vcmask 1043456
      %v184 = vsel %vm182, %v178, 0
      %186 = vmatprep.subr.bf16.mxu0 0
      %187 = vmatpush1.bf16.msra.mxu0 %v184
      %188 = vmatprep.subr.bf16.mxu0 0
      %189 = vmatpush1.bf16.msra.mxu0 0
      %190 = vmatprep.subr.bf16.mxu0 0
      %191 = vmatpush1.bf16.msra.mxu0 0
      %192 = vmatprep.subr.bf16.mxu0 0
      %193 = vmatpush1.bf16.msra.mxu0 0
      %194 = vmatprep.subr.bf16.mxu0 0
      %195 = vmatpush1.bf16.msra.mxu0 0
      %196 = vmatprep.subr.bf16.mxu0 0
      %197 = vmatpush1.bf16.msra.mxu0 0
      %198 = vmatprep.subr.bf16.mxu0 0
      %199 = vmatpush1.bf16.msra.mxu0 0
      %200 = vmatprep.subr.bf16.mxu0 0
      %201 = vmatpush1.bf16.msra.mxu0 0
      %202 = vmatprep.subr.bf16.mxu0 0
      %203 = vmatpush1.bf16.msra.mxu0 0
      %204 = vmatprep.subr.bf16.mxu0 0
      %205 = vmatpush1.bf16.msra.mxu0 0
      %206 = vmatprep.subr.bf16.mxu0 0
      %207 = vmatpush1.bf16.msra.mxu0 0
      %208 = vmatprep.subr.bf16.mxu0 0
      %209 = vmatpush1.bf16.msra.mxu0 0
      %210 = vmatprep.subr.bf16.mxu0 0
      %211 = vmatpush1.bf16.msra.mxu0 0
      %212 = vmatprep.subr.bf16.mxu0 0
      %213 = vmatpush1.bf16.msra.mxu0 0
      %214 = vmatprep.subr.bf16.mxu0 0
      %215 = vmatpush1.bf16.msra.mxu0 0
      %216 = vmatprep.subr.bf16.mxu0 0
      %217 = vmatpush1.bf16.msra.mxu0 0
      %218 = vmatprep.mubr.bf16.mxu0 0
      %219 = vmatmul.mubr.bf16.gmra.mrb[0].mxu0 %v180
      %v220 = vpop.f32.mrb[0].mxu0
      %v221 = vadd.f32 0.0, %v220
      %v222 = vpop.f32.mrb[0].mxu0
      %v223 = vpop.f32.mrb[0].mxu0
      %v224 = vpop.f32.mrb[0].mxu0
      %225 = vdwg.mxu0
      %v226 = vmul.f32 %v221, %v175
      %227 = vrot.lane.b32.xlu0 %v116, 120
      %v228 = vpop.permute.xlu0 %227
      %229 = vrot.lane.b32.xlu0 %v116, 88
      %v230 = vpop.permute.xlu0 %229
      %v232 = vsel %vm119, %v228, 0
      %v235 = vsel %vm119, %v230, 0
      %237 = vmatprep.subr.bf16.mxu0 0
      %238 = vmatpush1.bf16.xpose.msra.mxu0 %v235
      %239 = vmatprep.subr.bf16.mxu0 0
      %240 = vmatpush1.bf16.xpose.msra.mxu0 0
      %241 = vmatprep.subr.bf16.mxu0 0
      %242 = vmatpush1.bf16.xpose.msra.mxu0 0
      %243 = vmatprep.subr.bf16.mxu0 0
      %244 = vmatpush1.bf16.xpose.msra.mxu0 0
      %245 = vmatprep.subr.bf16.mxu0 0
      %246 = vmatpush1.bf16.xpose.msra.mxu0 0
      %247 = vmatprep.subr.bf16.mxu0 0
      %248 = vmatpush1.bf16.xpose.msra.mxu0 0
      %249 = vmatprep.subr.bf16.mxu0 0
      %250 = vmatpush1.bf16.xpose.msra.mxu0 0
      %251 = vmatprep.subr.bf16.mxu0 0
      %252 = vmatpush1.bf16.xpose.msra.mxu0 0
      %253 = vmatprep.subr.bf16.mxu0 0
      %254 = vmatpush1.bf16.xpose.msra.mxu0 0
      %255 = vmatprep.subr.bf16.mxu0 0
      %256 = vmatpush1.bf16.xpose.msra.mxu0 0
      %257 = vmatprep.subr.bf16.mxu0 0
      %258 = vmatpush1.bf16.xpose.msra.mxu0 0
      %259 = vmatprep.subr.bf16.mxu0 0
      %260 = vmatpush1.bf16.xpose.msra.mxu0 0
      %261 = vmatprep.subr.bf16.mxu0 0
      %262 = vmatpush1.bf16.xpose.msra.mxu0 0
      %263 = vmatprep.subr.bf16.mxu0 0
      %264 = vmatpush1.bf16.xpose.msra.mxu0 0
      %265 = vmatprep.subr.bf16.mxu0 0
      %266 = vmatpush1.bf16.xpose.msra.mxu0 0
      %267 = vmatprep.subr.bf16.mxu0 0
      %268 = vmatpush1.bf16.xpose.msra.mxu0 0
      %269 = vmatprep.mubr.bf16.mxu0 0
      %270 = vmatmul.mubr.bf16.gmra.mrb[0].mxu0 %v232
      %v271 = vpop.f32.mrb[0].mxu0
      %v272 = vadd.f32 0.0, %v271
      %v273 = vpop.f32.mrb[0].mxu0
      %v274 = vpop.f32.mrb[0].mxu0
      %v275 = vpop.f32.mrb[0].mxu0
      %276 = vdwg.mxu0
      %v277 = vsel %vm119, %v272, -inf
      %278 = vmax.xlane.f32.xlu0 %v277
      %v279 = vpop.xlane.xlu0 %278
      %v280 = vsub.f32 %v272, %v279
      %v281 = vmul.f32 %v280, 1.442695
      %v282 = vpow.pop %v281
      %v283 = vsel %vm119, %v282, 0.0
      %284 = vadd.xlane.f32.xlu0 %v283
      %v285 = vpop.xlane.xlu0 %284
      %v286 = vrcp.pop %v285
      %v287 = vpack.c.bf16 %v282, %v282
      %288 = vrot.lane.b32.xlu0 %v116, 56
      %v289 = vpop.permute.xlu0 %288
      %v291 = vsel %vm119, %v287, 0
      %v294 = vsel %vm182, %v289, 0
      %296 = vmatprep.subr.bf16.mxu0 0
      %297 = vmatpush1.bf16.msra.mxu0 %v294
      %298 = vmatprep.subr.bf16.mxu0 0
      %299 = vmatpush1.bf16.msra.mxu0 0
      %300 = vmatprep.subr.bf16.mxu0 0
      %301 = vmatpush1.bf16.msra.mxu0 0
      %302 = vmatprep.subr.bf16.mxu0 0
      %303 = vmatpush1.bf16.msra.mxu0 0
      %304 = vmatprep.subr.bf16.mxu0 0
      %305 = vmatpush1.bf16.msra.mxu0 0
      %306 = vmatprep.subr.bf16.mxu0 0
      %307 = vmatpush1.bf16.msra.mxu0 0
      %308 = vmatprep.subr.bf16.mxu0 0
      %309 = vmatpush1.bf16.msra.mxu0 0
      %310 = vmatprep.subr.bf16.mxu0 0
      %311 = vmatpush1.bf16.msra.mxu0 0
      %312 = vmatprep.subr.bf16.mxu0 0
      %313 = vmatpush1.bf16.msra.mxu0 0
      %314 = vmatprep.subr.bf16.mxu0 0
      %315 = vmatpush1.bf16.msra.mxu0 0
      %316 = vmatprep.subr.bf16.mxu0 0
      %317 = vmatpush1.bf16.msra.mxu0 0
      %318 = vmatprep.subr.bf16.mxu0 0
      %319 = vmatpush1.bf16.msra.mxu0 0
      %320 = vmatprep.subr.bf16.mxu0 0
      %321 = vmatpush1.bf16.msra.mxu0 0
      %322 = vmatprep.subr.bf16.mxu0 0
      %323 = vmatpush1.bf16.msra.mxu0 0
      %324 = vmatprep.subr.bf16.mxu0 0
      %325 = vmatpush1.bf16.msra.mxu0 0
      %326 = vmatprep.subr.bf16.mxu0 0
      %327 = vmatpush1.bf16.msra.mxu0 0
      %328 = vmatprep.mubr.bf16.mxu0 0
      %329 = vmatmul.mubr.bf16.gmra.mrb[0].mxu0 %v291
      %v330 = vpop.f32.mrb[0].mxu0
      %v331 = vadd.f32 0.0, %v330
      %v332 = vpop.f32.mrb[0].mxu0
      %v333 = vpop.f32.mrb[0].mxu0
      %v334 = vpop.f32.mrb[0].mxu0
      %335 = vdwg.mxu0
      %v336 = vmul.f32 %v331, %v286
      %337 = vrot.lane.b32.xlu0 %v116, 112
      %v338 = vpop.permute.xlu0 %337
      %339 = vrot.lane.b32.xlu0 %v116, 80
      %v340 = vpop.permute.xlu0 %339
      %v342 = vsel %vm119, %v338, 0
      %v345 = vsel %vm119, %v340, 0
      %347 = vmatprep.subr.bf16.mxu0 0
      %348 = vmatpush1.bf16.xpose.msra.mxu0 %v345
      %349 = vmatprep.subr.bf16.mxu0 0
      %350 = vmatpush1.bf16.xpose.msra.mxu0 0
      %351 = vmatprep.subr.bf16.mxu0 0
      %352 = vmatpush1.bf16.xpose.msra.mxu0 0
      %353 = vmatprep.subr.bf16.mxu0 0
      %354 = vmatpush1.bf16.xpose.msra.mxu0 0
      %355 = vmatprep.subr.bf16.mxu0 0
      %356 = vmatpush1.bf16.xpose.msra.mxu0 0
      %357 = vmatprep.subr.bf16.mxu0 0
      %358 = vmatpush1.bf16.xpose.msra.mxu0 0
      %359 = vmatprep.subr.bf16.mxu0 0
      %360 = vmatpush1.bf16.xpose.msra.mxu0 0
      %361 = vmatprep.subr.bf16.mxu0 0
      %362 = vmatpush1.bf16.xpose.msra.mxu0 0
      %363 = vmatprep.subr.bf16.mxu0 0
      %364 = vmatpush1.bf16.xpose.msra.mxu0 0
      %365 = vmatprep.subr.bf16.mxu0 0
      %366 = vmatpush1.bf16.xpose.msra.mxu0 0
      %367 = vmatprep.subr.bf16.mxu0 0
      %368 = vmatpush1.bf16.xpose.msra.mxu0 0
      %369 = vmatprep.subr.bf16.mxu0 0
      %370 = vmatpush1.bf16.xpose.msra.mxu0 0
      %371 = vmatprep.subr.bf16.mxu0 0
      %372 = vmatpush1.bf16.xpose.msra.mxu0 0
      %373 = vmatprep.subr.bf16.mxu0 0
      %374 = vmatpush1.bf16.xpose.msra.mxu0 0
      %375 = vmatprep.subr.bf16.mxu0 0
      %376 = vmatpush1.bf16.xpose.msra.mxu0 0
      %377 = vmatprep.subr.bf16.mxu0 0
      %378 = vmatpush1.bf16.xpose.msra.mxu0 0
      %379 = vmatprep.mubr.bf16.mxu0 0
      %380 = vmatmul.mubr.bf16.gmra.mrb[0].mxu0 %v342
      %v381 = vpop.f32.mrb[0].mxu0
      %v382 = vadd.f32 0.0, %v381
      %v383 = vpop.f32.mrb[0].mxu0
      %v384 = vpop.f32.mrb[0].mxu0
      %v385 = vpop.f32.mrb[0].mxu0
      %386 = vdwg.mxu0
      %v387 = vsel %vm119, %v382, -inf
      %388 = vmax.xlane.f32.xlu0 %v387
      %v389 = vpop.xlane.xlu0 %388
      %v390 = vsub.f32 %v382, %v389
      %v391 = vmul.f32 %v390, 1.442695
      %v392 = vpow.pop %v391
      %v393 = vsel %vm119, %v392, 0.0
      %394 = vadd.xlane.f32.xlu0 %v393
      %v395 = vpop.xlane.xlu0 %394
      %v396 = vrcp.pop %v395
      %v397 = vpack.c.bf16 %v392, %v392
      %398 = vrot.lane.b32.xlu0 %v116, 48
      %v399 = vpop.permute.xlu0 %398
      %v401 = vsel %vm119, %v397, 0
      %v404 = vsel %vm182, %v399, 0
      %406 = vmatprep.subr.bf16.mxu0 0
      %407 = vmatpush1.bf16.msra.mxu0 %v404
      %408 = vmatprep.subr.bf16.mxu0 0
      %409 = vmatpush1.bf16.msra.mxu0 0
      %410 = vmatprep.subr.bf16.mxu0 0
      %411 = vmatpush1.bf16.msra.mxu0 0
      %412 = vmatprep.subr.bf16.mxu0 0
      %413 = vmatpush1.bf16.msra.mxu0 0
      %414 = vmatprep.subr.bf16.mxu0 0
      %415 = vmatpush1.bf16.msra.mxu0 0
      %416 = vmatprep.subr.bf16.mxu0 0
      %417 = vmatpush1.bf16.msra.mxu0 0
      %418 = vmatprep.subr.bf16.mxu0 0
      %419 = vmatpush1.bf16.msra.mxu0 0
      %420 = vmatprep.subr.bf16.mxu0 0
      %421 = vmatpush1.bf16.msra.mxu0 0
      %422 = vmatprep.subr.bf16.mxu0 0
      %423 = vmatpush1.bf16.msra.mxu0 0
      %424 = vmatprep.subr.bf16.mxu0 0
      %425 = vmatpush1.bf16.msra.mxu0 0
      %426 = vmatprep.subr.bf16.mxu0 0
      %427 = vmatpush1.bf16.msra.mxu0 0
      %428 = vmatprep.subr.bf16.mxu0 0
      %429 = vmatpush1.bf16.msra.mxu0 0
      %430 = vmatprep.subr.bf16.mxu0 0
      %431 = vmatpush1.bf16.msra.mxu0 0
      %432 = vmatprep.subr.bf16.mxu0 0
      %433 = vmatpush1.bf16.msra.mxu0 0
      %434 = vmatprep.subr.bf16.mxu0 0
      %435 = vmatpush1.bf16.msra.mxu0 0
      %436 = vmatprep.subr.bf16.mxu0 0
      %437 = vmatpush1.bf16.msra.mxu0 0
      %438 = vmatprep.mubr.bf16.mxu0 0
      %439 = vmatmul.mubr.bf16.gmra.mrb[0].mxu0 %v401
      %v440 = vpop.f32.mrb[0].mxu0
      %v441 = vadd.f32 0.0, %v440
      %v442 = vpop.f32.mrb[0].mxu0
      %v443 = vpop.f32.mrb[0].mxu0
      %v444 = vpop.f32.mrb[0].mxu0
      %445 = vdwg.mxu0
      %v446 = vmul.f32 %v441, %v396
      %447 = vrot.lane.b32.xlu0 %v116, 104
      %v448 = vpop.permute.xlu0 %447
      %449 = vrot.lane.b32.xlu0 %v116, 72
      %v450 = vpop.permute.xlu0 %449
      %v452 = vsel %vm119, %v448, 0
      %v455 = vsel %vm119, %v450, 0
      %457 = vmatprep.subr.bf16.mxu0 0
      %458 = vmatpush1.bf16.xpose.msra.mxu0 %v455
      %459 = vmatprep.subr.bf16.mxu0 0
      %460 = vmatpush1.bf16.xpose.msra.mxu0 0
      %461 = vmatprep.subr.bf16.mxu0 0
      %462 = vmatpush1.bf16.xpose.msra.mxu0 0
      %463 = vmatprep.subr.bf16.mxu0 0
      %464 = vmatpush1.bf16.xpose.msra.mxu0 0
      %465 = vmatprep.subr.bf16.mxu0 0
      %466 = vmatpush1.bf16.xpose.msra.mxu0 0
      %467 = vmatprep.subr.bf16.mxu0 0
      %468 = vmatpush1.bf16.xpose.msra.mxu0 0
      %469 = vmatprep.subr.bf16.mxu0 0
      %470 = vmatpush1.bf16.xpose.msra.mxu0 0
      %471 = vmatprep.subr.bf16.mxu0 0
      %472 = vmatpush1.bf16.xpose.msra.mxu0 0
      %473 = vmatprep.subr.bf16.mxu0 0
      %474 = vmatpush1.bf16.xpose.msra.mxu0 0
      %475 = vmatprep.subr.bf16.mxu0 0
      %476 = vmatpush1.bf16.xpose.msra.mxu0 0
      %477 = vmatprep.subr.bf16.mxu0 0
      %478 = vmatpush1.bf16.xpose.msra.mxu0 0
      %479 = vmatprep.subr.bf16.mxu0 0
      %480 = vmatpush1.bf16.xpose.msra.mxu0 0
      %481 = vmatprep.subr.bf16.mxu0 0
      %482 = vmatpush1.bf16.xpose.msra.mxu0 0
      %483 = vmatprep.subr.bf16.mxu0 0
      %484 = vmatpush1.bf16.xpose.msra.mxu0 0
      %485 = vmatprep.subr.bf16.mxu0 0
      %486 = vmatpush1.bf16.xpose.msra.mxu0 0
      %487 = vmatprep.subr.bf16.mxu0 0
      %488 = vmatpush1.bf16.xpose.msra.mxu0 0
      %489 = vmatprep.mubr.bf16.mxu0 0
      %490 = vmatmul.mubr.bf16.gmra.mrb[0].mxu0 %v452
      %v491 = vpop.f32.mrb[0].mxu0
      %v492 = vadd.f32 0.0, %v491
      %v493 = vpop.f32.mrb[0].mxu0
      %v494 = vpop.f32.mrb[0].mxu0
      %v495 = vpop.f32.mrb[0].mxu0
      %496 = vdwg.mxu0
      %v497 = vsel %vm119, %v492, -inf
      %498 = vmax.xlane.f32.xlu0 %v497
      %v499 = vpop.xlane.xlu0 %498
      %v500 = vsub.f32 %v492, %v499
      %v501 = vmul.f32 %v500, 1.442695
      %v502 = vpow.pop %v501
      %v503 = vsel %vm119, %v502, 0.0
      %504 = vadd.xlane.f32.xlu0 %v503
      %v505 = vpop.xlane.xlu0 %504
      %v506 = vrcp.pop %v505
      %v507 = vpack.c.bf16 %v502, %v502
      %508 = vrot.lane.b32.xlu0 %v116, 40
      %v509 = vpop.permute.xlu0 %508
      %v511 = vsel %vm119, %v507, 0
      %v514 = vsel %vm182, %v509, 0
      %516 = vmatprep.subr.bf16.mxu0 0
      %517 = vmatpush1.bf16.msra.mxu0 %v514
      %518 = vmatprep.subr.bf16.mxu0 0
      %519 = vmatpush1.bf16.msra.mxu0 0
      %520 = vmatprep.subr.bf16.mxu0 0
      %521 = vmatpush1.bf16.msra.mxu0 0
      %522 = vmatprep.subr.bf16.mxu0 0
      %523 = vmatpush1.bf16.msra.mxu0 0
      %524 = vmatprep.subr.bf16.mxu0 0
      %525 = vmatpush1.bf16.msra.mxu0 0
      %526 = vmatprep.subr.bf16.mxu0 0
      %527 = vmatpush1.bf16.msra.mxu0 0
      %528 = vmatprep.subr.bf16.mxu0 0
      %529 = vmatpush1.bf16.msra.mxu0 0
      %530 = vmatprep.subr.bf16.mxu0 0
      %531 = vmatpush1.bf16.msra.mxu0 0
      %532 = vmatprep.subr.bf16.mxu0 0
      %533 = vmatpush1.bf16.msra.mxu0 0
      %534 = vmatprep.subr.bf16.mxu0 0
      %535 = vmatpush1.bf16.msra.mxu0 0
      %536 = vmatprep.subr.bf16.mxu0 0
      %537 = vmatpush1.bf16.msra.mxu0 0
      %538 = vmatprep.subr.bf16.mxu0 0
      %539 = vmatpush1.bf16.msra.mxu0 0
      %540 = vmatprep.subr.bf16.mxu0 0
      %541 = vmatpush1.bf16.msra.mxu0 0
      %542 = vmatprep.subr.bf16.mxu0 0
      %543 = vmatpush1.bf16.msra.mxu0 0
      %544 = vmatprep.subr.bf16.mxu0 0
      %545 = vmatpush1.bf16.msra.mxu0 0
      %546 = vmatprep.subr.bf16.mxu0 0
      %547 = vmatpush1.bf16.msra.mxu0 0
      %548 = vmatprep.mubr.bf16.mxu0 0
      %549 = vmatmul.mubr.bf16.gmra.mrb[0].mxu0 %v511
      %v550 = vpop.f32.mrb[0].mxu0
      %v551 = vadd.f32 0.0, %v550
      %v552 = vpop.f32.mrb[0].mxu0
      %v553 = vpop.f32.mrb[0].mxu0
      %v554 = vpop.f32.mrb[0].mxu0
      %555 = vdwg.mxu0
      %v556 = vmul.f32 %v551, %v506
      %558 = vrot.lane.b32.xlu0 %v336, 8
      %v559 = vpop.permute.xlu0 %558
      %562 = vrot.lane.b32.xlu0 %v446, 16
      %v563 = vpop.permute.xlu0 %562
      %566 = vrot.lane.b32.xlu0 %v556, 24
      %v567 = vpop.permute.xlu0 %566
      %v569 = vsel %vm119, %v226, %v559
      %vm570 = vcmask 130048
      %v571 = vsel %vm570, %v569, %v563
      %vm572 = vcmask 195584
      %v573 = vsel %vm572, %v571, %v567
      %v574 = vpack.c.bf16 %v573, %v573
      %vm575 = vcmask 257024
      %576 = vst.msk [vmem:[%s111] sm:$0xf] %vm575, %v574
      %p577 = scmp.lt.s32.totalorder %s12, 1
      %s578 = scalar_select %p577, %s12, 1
      %s579 = smul.addr %s578, 4
      %s580 = scalar_lea.vmem %s1, %s579
      // Predicated region
      $region25: #{bert_forward.22} parent=23 // pred_check
        %p581 = pneg %p56
      $region26: #{bert_forward.22} parent=23 // pred_check_branch
        %583 = sbr.rel (%p581) target = $region28
      $region27: #{bert_forward.22} parent=23 // pred_region
        _
      $region28: #{bert_forward.22} parent=23 // pred_fallthru
        _
    $region24: #{bert_forward.22} parent=5 // pred_fallthru
      _
    %p584 = scmp.le.s32.totalorder 2, %s7
    // Predicated region
    $region29: #{bert_forward.22} parent=5 // pred_check
      %p585 = pneg %p584
    $region30: #{bert_forward.22} parent=5 // pred_check_branch
      %587 = sbr.rel (%p585) target = $region32
    $region31: #{bert_forward.22} parent=5 // pred_region
      %s588 = ssub.s32 %s7, 2
      // Predicated region
      $region33: #{bert_forward.22} parent=31 // pred_check
        %p589 = pneg %p62
      $region34: #{bert_forward.22} parent=31 // pred_check_branch
        %591 = sbr.rel (%p589) target = $region36
      $region35: #{bert_forward.22} parent=31 // pred_region
        %p592 = scmp.lt.s32.totalorder %s13, 1
        %s593 = scalar_select %p592, %s13, 1
        %s594 = smul.addr %s593, 4
        %s595 = scalar_lea.vmem %s1, %s594
      $region36: #{bert_forward.22} parent=31 // pred_fallthru
        _
    $region32: #{bert_forward.22} parent=5 // pred_fallthru
      _
  $region6: #{bert_forward.22} parent=0 // loop_footer
    %s11 = sadd.s32 1, %s7
  $region7: #{bert_forward.22} parent=0 // loop_footer_branch
    %6 = sbr.rel target = $region3
  $region8: #{bert_forward.22} parent=0 // loop_exit
    _

// kernel: bert_forward.25
$region0: #{bert_forward.25}
  #allocation0 [shape = 'u32[]', space=smem, size = 0x4, offset = 0x4, fixed_abs, tag = 'smem constant byte address 0x4 - core index']
  #allocation1 [shape = 'u32[144,128]{1,0:T(1,128)}', space=vmem, size = 0x12000, scoped, tag = 'internal scratch']
  #allocation2 [shape = 'f32[16,256]{1,0:T(8,128)}', space=vmem, size = 0x4000, scoped, tag = 'scratch operand']
  %s0 = inlined_call_operand.vmem [shape: bf16[16,128], index: 0, kind: input, shape index: {}]
  %s1 = inlined_call_operand.vmem [shape: bf16[128,256], index: 1, kind: input, shape index: {}]
  %s2 = inlined_call_operand.vmem [shape: f32[1,256], index: 2, kind: input, shape index: {}]
  %s3 = inlined_call_operand.vmem [shape: bf16[16,256], index: 3, kind: output, shape index: {}]
  %s4 = sld [smem:[#allocation0]]
  $region30: #{bert_forward.25} parent=0
    _
  %s6 = ssub.s32 1, %s4
  %s7 = scalar_select 0, %s6, %s4
  // Predicated region
  $region2: #{bert_forward.25} parent=0 // pred_check
    _
  $region3: #{bert_forward.25} parent=0 // pred_check_branch
    %9 = sbr.rel (0) target = $region5
  $region4: #{bert_forward.25} parent=0 // pred_region
    _
  $region5: #{bert_forward.25} parent=0 // pred_fallthru
    _
  // Predicated region
  $region6: #{bert_forward.25} parent=0 // pred_check
    _
  $region7: #{bert_forward.25} parent=0 // pred_check_branch
    %11 = sbr.rel (0) target = $region9
  $region8: #{bert_forward.25} parent=0 // pred_region
    _
  $region9: #{bert_forward.25} parent=0 // pred_fallthru
    _
  // Predicated region
  $region10: #{bert_forward.25} parent=0 // pred_check
    _
  $region11: #{bert_forward.25} parent=0 // pred_check_branch
    %13 = sbr.rel (0) target = $region13
  $region12: #{bert_forward.25} parent=0 // pred_region
    _
  $region13: #{bert_forward.25} parent=0 // pred_fallthru
    _
  %p15 = scmp.eq.s32.totalorder 0, 0
  // Predicated region
  $region14: #{bert_forward.25} parent=0 // pred_check
    %p16 = pneg %p15
  $region15: #{bert_forward.25} parent=0 // pred_check_branch
    %18 = sbr.rel (%p16) target = $region17
  $region16: #{bert_forward.25} parent=0 // pred_region
    %19 = vst [vmem:[#allocation2] sm:$0xff] 0.0
    %20 = vst [vmem:[#allocation2 + $0x8] sm:$0xff] 0.0
    %21 = vst [vmem:[#allocation2 + $0x10] sm:$0xff] 0.0
    %22 = vst [vmem:[#allocation2 + $0x18] sm:$0xff] 0.0
  $region17: #{bert_forward.25} parent=0 // pred_fallthru
    _
  %v23 = vld [vmem:[#allocation2] sm:$0xff]
  %v24 = vld [vmem:[#allocation2 + $0x8] sm:$0xff]
  %v25 = vld [vmem:[#allocation2 + $0x10] sm:$0xff]
  %v26 = vld [vmem:[#allocation2 + $0x18] sm:$0xff]
  %v27 = vld [vmem:[%s0] sm:$0xf]
  %v28 = vld [vmem:[%s0 + $0x4] sm:$0xf]
  %v29 = vld [vmem:[%s1] sm:$0xff]
  %v30 = vld [vmem:[%s1 + $0x8] sm:$0xff]
  %v31 = vld [vmem:[%s1 + $0x10] sm:$0xff]
  %v32 = vld [vmem:[%s1 + $0x18] sm:$0xff]
  %v33 = vld [vmem:[%s1 + $0x20] sm:$0xff]
  %v34 = vld [vmem:[%s1 + $0x28] sm:$0xff]
  %v35 = vld [vmem:[%s1 + $0x30] sm:$0xff]
  %v36 = vld [vmem:[%s1 + $0x38] sm:$0xff]
  %v37 = vld [vmem:[%s1 + $0x40] sm:$0xff]
  %v38 = vld [vmem:[%s1 + $0x48] sm:$0xff]
  %v39 = vld [vmem:[%s1 + $0x50] sm:$0xff]
  %v40 = vld [vmem:[%s1 + $0x58] sm:$0xff]
  %v41 = vld [vmem:[%s1 + $0x60] sm:$0xff]
  %v42 = vld [vmem:[%s1 + $0x68] sm:$0xff]
  %v43 = vld [vmem:[%s1 + $0x70] sm:$0xff]
  %v44 = vld [vmem:[%s1 + $0x78] sm:$0xff]
  %v47 = vunpack.c.l.b16 %v27
  %v48 = vunpack.c.l.b16 %v28
  %v49 = vpack.c.b16 %v48, %v47
  %v67 = vunpack.c.l.b16 %v29
  %v68 = vunpack.c.h.b16 %v29
  %v69 = vunpack.c.l.b16 %v30
  %v70 = vunpack.c.h.b16 %v30
  %v71 = vunpack.c.l.b16 %v31
  %v72 = vunpack.c.h.b16 %v31
  %v73 = vunpack.c.l.b16 %v32
  %v74 = vunpack.c.h.b16 %v32
  %v75 = vunpack.c.l.b16 %v33
  %v76 = vunpack.c.h.b16 %v33
  %v77 = vunpack.c.l.b16 %v34
  %v78 = vunpack.c.h.b16 %v34
  %v79 = vunpack.c.l.b16 %v35
  %v80 = vunpack.c.h.b16 %v35
  %v81 = vunpack.c.l.b16 %v36
  %v82 = vunpack.c.h.b16 %v36
  %v83 = vunpack.c.l.b16 %v37
  %v84 = vunpack.c.h.b16 %v37
  %v85 = vunpack.c.l.b16 %v38
  %v86 = vunpack.c.h.b16 %v38
  %v87 = vunpack.c.l.b16 %v39
  %v88 = vunpack.c.h.b16 %v39
  %v89 = vunpack.c.l.b16 %v40
  %v90 = vunpack.c.h.b16 %v40
  %v91 = vunpack.c.l.b16 %v41
  %v92 = vunpack.c.h.b16 %v41
  %v93 = vunpack.c.l.b16 %v42
  %v94 = vunpack.c.h.b16 %v42
  %v95 = vunpack.c.l.b16 %v43
  %v96 = vunpack.c.h.b16 %v43
  %v97 = vunpack.c.l.b16 %v44
  %v98 = vunpack.c.h.b16 %v44
  %v99 = vpack.c.b16 %v69, %v67
  %v100 = vpack.c.b16 %v70, %v68
  %v101 = vpack.c.b16 %v73, %v71
  %v102 = vpack.c.b16 %v74, %v72
  %v103 = vpack.c.b16 %v77, %v75
  %v104 = vpack.c.b16 %v78, %v76
  %v105 = vpack.c.b16 %v81, %v79
  %v106 = vpack.c.b16 %v82, %v80
  %v107 = vpack.c.b16 %v85, %v83
  %v108 = vpack.c.b16 %v86, %v84
  %v109 = vpack.c.b16 %v89, %v87
  %v110 = vpack.c.b16 %v90, %v88
  %v111 = vpack.c.b16 %v93, %v91
  %v112 = vpack.c.b16 %v94, %v92
  %v113 = vpack.c.b16 %v97, %v95
  %v114 = vpack.c.b16 %v98, %v96
  %131 = vmatprep.subr.bf16.mxu0 %v100
  %132 = vmatpush1.bf16.msra.mxu0 %v99
  %133 = vmatprep.subr.bf16.mxu0 %v102
  %134 = vmatpush1.bf16.msra.mxu0 %v101
  %135 = vmatprep.subr.bf16.mxu0 %v104
  %136 = vmatpush1.bf16.msra.mxu0 %v103
  %137 = vmatprep.subr.bf16.mxu0 %v106
  %138 = vmatpush1.bf16.msra.mxu0 %v105
  %139 = vmatprep.subr.bf16.mxu0 %v108
  %140 = vmatpush1.bf16.msra.mxu0 %v107
  %141 = vmatprep.subr.bf16.mxu0 %v110
  %142 = vmatpush1.bf16.msra.mxu0 %v109
  %143 = vmatprep.subr.bf16.mxu0 %v112
  %144 = vmatpush1.bf16.msra.mxu0 %v111
  %145 = vmatprep.subr.bf16.mxu0 %v114
  %146 = vmatpush1.bf16.msra.mxu0 %v113
  %147 = vmatprep.subr.bf16.mxu0 0
  %148 = vmatpush1.bf16.msra.mxu0 0
  %149 = vmatprep.subr.bf16.mxu0 0
  %150 = vmatpush1.bf16.msra.mxu0 0
  %151 = vmatprep.subr.bf16.mxu0 0
  %152 = vmatpush1.bf16.msra.mxu0 0
  %153 = vmatprep.subr.bf16.mxu0 0
  %154 = vmatpush1.bf16.msra.mxu0 0
  %155 = vmatprep.subr.bf16.mxu0 0
  %156 = vmatpush1.bf16.msra.mxu0 0
  %157 = vmatprep.subr.bf16.mxu0 0
  %158 = vmatpush1.bf16.msra.mxu0 0
  %159 = vmatprep.subr.bf16.mxu0 0
  %160 = vmatpush1.bf16.msra.mxu0 0
  %161 = vmatprep.subr.bf16.mxu0 0
  %162 = vmatpush1.bf16.msra.mxu0 0
  %163 = vmatprep.mubr.bf16.mxu0 0
  %164 = vmatmul.mubr.bf16.gmra.mrb[0].mxu0 %v49
  %v165 = vpop.f32.mrb[0].mxu0
  %v166 = vadd.f32 0.0, %v165
  %v167 = vpop.f32.mrb[0].mxu0
  %v168 = vadd.f32 0.0, %v167
  %v169 = vpop.f32.mrb[0].mxu0
  %v170 = vadd.f32 0.0, %v169
  %v171 = vpop.f32.mrb[0].mxu0
  %v172 = vadd.f32 0.0, %v171
  %173 = vdwg.mxu0
  %v174 = vadd.f32 %v23, %v166
  %v175 = vadd.f32 %v24, %v168
  %v176 = vadd.f32 %v25, %v170
  %v177 = vadd.f32 %v26, %v172
  %178 = vst [vmem:[#allocation2] sm:$0xff] %v174
  %179 = vst [vmem:[#allocation2 + $0x8] sm:$0xff] %v175
  %180 = vst [vmem:[#allocation2 + $0x10] sm:$0xff] %v176
  %181 = vst [vmem:[#allocation2 + $0x18] sm:$0xff] %v177
  // Predicated region
  $region18: #{bert_forward.25} parent=0 // pred_check
    %p182 = pneg %p15
  $region19: #{bert_forward.25} parent=0 // pred_check_branch
    %184 = sbr.rel (%p182) target = $region21
  $region20: #{bert_forward.25} parent=0 // pred_region
    %v185 = vld [vmem:[#allocation2] sm:$0xff]
    %v186 = vld [vmem:[#allocation2 + $0x8] sm:$0xff]
    %v187 = vld [vmem:[#allocation2 + $0x10] sm:$0xff]
    %v188 = vld [vmem:[#allocation2 + $0x18] sm:$0xff]
    %v189 = vld [vmem:[%s2] sm:$0x3]
    %v191 = vlaneseq
    %v192 = vshrl.u32 %v191, 7
    %v193 = vsub.s32 0, %v192
    %v194 = vrot.slane %v189, %v193
    %v195 = vlaneseq
    %v196 = vshrl.u32 %v195, 7
    %v197 = vsub.s32 1, %v196
    %v198 = vrot.slane %v189, %v197
    %v201 = vadd.f32 %v185, %v194
    %v202 = vadd.f32 %v186, %v198
    %v203 = vadd.f32 %v187, %v194
    %v204 = vadd.f32 %v188, %v198
    %v205 = vmax.f32 %v201, 0.0
    %v206 = vmax.f32 %v202, 0.0
    %v207 = vmax.f32 %v203, 0.0
    %v208 = vmax.f32 %v204, 0.0
    %v209 = vpack.c.bf16 %v207, %v205
    %v210 = vpack.c.bf16 %v208, %v206
    %v213 = vunpack.c.l.b16 %v209
    %v214 = vunpack.c.l.b16 %v210
    %v215 = vunpack.c.h.b16 %v209
    %v216 = vunpack.c.h.b16 %v210
    %v217 = vpack.c.b16 %v214, %v213
    %v218 = vpack.c.b16 %v216, %v215
    %221 = vst [vmem:[%s3] sm:$0xff] %v217
    %222 = vst [vmem:[%s3 + $0x8] sm:$0xff] %v218
  $region21: #{bert_forward.25} parent=0 // pred_fallthru
    _
  // Predicated region
  $region22: #{bert_forward.25} parent=0 // pred_check
    _
  $region23: #{bert_forward.25} parent=0 // pred_check_branch
    %224 = sbr.rel (0) target = $region25
  $region24: #{bert_forward.25} parent=0 // pred_region
    _
  $region25: #{bert_forward.25} parent=0 // pred_fallthru
    _
  // Predicated region
  $region26: #{bert_forward.25} parent=0 // pred_check
    _
  $region27: #{bert_forward.25} parent=0 // pred_check_branch
    %226 = sbr.rel (0) target = $region29
  $region28: #{bert_forward.25} parent=0 // pred_region
    _
  $region29: #{bert_forward.25} parent=0 // pred_fallthru
    _

// kernel: bert_forward.37
$region0: #{bert_forward.37}
  #allocation0 [shape = 'u32[]', space=smem, size = 0x4, offset = 0x4, fixed_abs, tag = 'smem constant byte address 0x4 - core index']
  #allocation1 [shape = 'u32[144,128]{1,0:T(1,128)}', space=vmem, size = 0x12000, scoped, tag = 'internal scratch']
  #allocation2 [shape = 'f32[16,256]{1,0:T(8,128)}', space=vmem, size = 0x4000, scoped, tag = 'scratch operand']
  %s0 = inlined_call_operand.vmem [shape: bf16[16,128], index: 0, kind: input, shape index: {}]
  %s1 = inlined_call_operand.vmem [shape: bf16[128,256], index: 1, kind: input, shape index: {}]
  %s2 = inlined_call_operand.vmem [shape: f32[1,256], index: 2, kind: input, shape index: {}]
  %s3 = inlined_call_operand.vmem [shape: bf16[16,256], index: 3, kind: output, shape index: {}]
  %s4 = sld [smem:[#allocation0]]
  $region30: #{bert_forward.37} parent=0
    _
  %s6 = ssub.s32 1, %s4
  %s7 = scalar_select 0, %s6, %s4
  // Predicated region
  $region2: #{bert_forward.37} parent=0 // pred_check
    _
  $region3: #{bert_forward.37} parent=0 // pred_check_branch
    %9 = sbr.rel (0) target = $region5
  $region4: #{bert_forward.37} parent=0 // pred_region
    _
  $region5: #{bert_forward.37} parent=0 // pred_fallthru
    _
  // Predicated region
  $region6: #{bert_forward.37} parent=0 // pred_check
    _
  $region7: #{bert_forward.37} parent=0 // pred_check_branch
    %11 = sbr.rel (0) target = $region9
  $region8: #{bert_forward.37} parent=0 // pred_region
    _
  $region9: #{bert_forward.37} parent=0 // pred_fallthru
    _
  // Predicated region
  $region10: #{bert_forward.37} parent=0 // pred_check
    _
  $region11: #{bert_forward.37} parent=0 // pred_check_branch
    %13 = sbr.rel (0) target = $region13
  $region12: #{bert_forward.37} parent=0 // pred_region
    _
  $region13: #{bert_forward.37} parent=0 // pred_fallthru
    _
  %p15 = scmp.eq.s32.totalorder 0, 0
  // Predicated region
  $region14: #{bert_forward.37} parent=0 // pred_check
    %p16 = pneg %p15
  $region15: #{bert_forward.37} parent=0 // pred_check_branch
    %18 = sbr.rel (%p16) target = $region17
  $region16: #{bert_forward.37} parent=0 // pred_region
    %19 = vst [vmem:[#allocation2] sm:$0xff] 0.0
    %20 = vst [vmem:[#allocation2 + $0x8] sm:$0xff] 0.0
    %21 = vst [vmem:[#allocation2 + $0x10] sm:$0xff] 0.0
    %22 = vst [vmem:[#allocation2 + $0x18] sm:$0xff] 0.0
  $region17: #{bert_forward.37} parent=0 // pred_fallthru
    _
  %v23 = vld [vmem:[#allocation2] sm:$0xff]
  %v24 = vld [vmem:[#allocation2 + $0x8] sm:$0xff]
  %v25 = vld [vmem:[#allocation2 + $0x10] sm:$0xff]
  %v26 = vld [vmem:[#allocation2 + $0x18] sm:$0xff]
  %v27 = vld [vmem:[%s0] sm:$0xf]
  %v28 = vld [vmem:[%s0 + $0x4] sm:$0xf]
  %v29 = vld [vmem:[%s1] sm:$0xff]
  %v30 = vld [vmem:[%s1 + $0x8] sm:$0xff]
  %v31 = vld [vmem:[%s1 + $0x10] sm:$0xff]
  %v32 = vld [vmem:[%s1 + $0x18] sm:$0xff]
  %v33 = vld [vmem:[%s1 + $0x20] sm:$0xff]
  %v34 = vld [vmem:[%s1 + $0x28] sm:$0xff]
  %v35 = vld [vmem:[%s1 + $0x30] sm:$0xff]
  %v36 = vld [vmem:[%s1 + $0x38] sm:$0xff]
  %v37 = vld [vmem:[%s1 + $0x40] sm:$0xff]
  %v38 = vld [vmem:[%s1 + $0x48] sm:$0xff]
  %v39 = vld [vmem:[%s1 + $0x50] sm:$0xff]
  %v40 = vld [vmem:[%s1 + $0x58] sm:$0xff]
  %v41 = vld [vmem:[%s1 + $0x60] sm:$0xff]
  %v42 = vld [vmem:[%s1 + $0x68] sm:$0xff]
  %v43 = vld [vmem:[%s1 + $0x70] sm:$0xff]
  %v44 = vld [vmem:[%s1 + $0x78] sm:$0xff]
  %v47 = vunpack.c.l.b16 %v27
  %v48 = vunpack.c.l.b16 %v28
  %v49 = vpack.c.b16 %v48, %v47
  %v67 = vunpack.c.l.b16 %v29
  %v68 = vunpack.c.h.b16 %v29
  %v69 = vunpack.c.l.b16 %v30
  %v70 = vunpack.c.h.b16 %v30
  %v71 = vunpack.c.l.b16 %v31
  %v72 = vunpack.c.h.b16 %v31
  %v73 = vunpack.c.l.b16 %v32
  %v74 = vunpack.c.h.b16 %v32
  %v75 = vunpack.c.l.b16 %v33
  %v76 = vunpack.c.h.b16 %v33
  %v77 = vunpack.c.l.b16 %v34
  %v78 = vunpack.c.h.b16 %v34
  %v79 = vunpack.c.l.b16 %v35
  %v80 = vunpack.c.h.b16 %v35
  %v81 = vunpack.c.l.b16 %v36
  %v82 = vunpack.c.h.b16 %v36
  %v83 = vunpack.c.l.b16 %v37
  %v84 = vunpack.c.h.b16 %v37
  %v85 = vunpack.c.l.b16 %v38
  %v86 = vunpack.c.h.b16 %v38
  %v87 = vunpack.c.l.b16 %v39
  %v88 = vunpack.c.h.b16 %v39
  %v89 = vunpack.c.l.b16 %v40
  %v90 = vunpack.c.h.b16 %v40
  %v91 = vunpack.c.l.b16 %v41
  %v92 = vunpack.c.h.b16 %v41
  %v93 = vunpack.c.l.b16 %v42
  %v94 = vunpack.c.h.b16 %v42
  %v95 = vunpack.c.l.b16 %v43
  %v96 = vunpack.c.h.b16 %v43
  %v97 = vunpack.c.l.b16 %v44
  %v98 = vunpack.c.h.b16 %v44
  %v99 = vpack.c.b16 %v69, %v67
  %v100 = vpack.c.b16 %v70, %v68
  %v101 = vpack.c.b16 %v73, %v71
  %v102 = vpack.c.b16 %v74, %v72
  %v103 = vpack.c.b16 %v77, %v75
  %v104 = vpack.c.b16 %v78, %v76
  %v105 = vpack.c.b16 %v81, %v79
  %v106 = vpack.c.b16 %v82, %v80
  %v107 = vpack.c.b16 %v85, %v83
  %v108 = vpack.c.b16 %v86, %v84
  %v109 = vpack.c.b16 %v89, %v87
  %v110 = vpack.c.b16 %v90, %v88
  %v111 = vpack.c.b16 %v93, %v91
  %v112 = vpack.c.b16 %v94, %v92
  %v113 = vpack.c.b16 %v97, %v95
  %v114 = vpack.c.b16 %v98, %v96
  %131 = vmatprep.subr.bf16.mxu0 %v100
  %132 = vmatpush1.bf16.msra.mxu0 %v99
  %133 = vmatprep.subr.bf16.mxu0 %v102
  %134 = vmatpush1.bf16.msra.mxu0 %v101
  %135 = vmatprep.subr.bf16.mxu0 %v104
  %136 = vmatpush1.bf16.msra.mxu0 %v103
  %137 = vmatprep.subr.bf16.mxu0 %v106
  %138 = vmatpush1.bf16.msra.mxu0 %v105
  %139 = vmatprep.subr.bf16.mxu0 %v108
  %140 = vmatpush1.bf16.msra.mxu0 %v107
  %141 = vmatprep.subr.bf16.mxu0 %v110
  %142 = vmatpush1.bf16.msra.mxu0 %v109
  %143 = vmatprep.subr.bf16.mxu0 %v112
  %144 = vmatpush1.bf16.msra.mxu0 %v111
  %145 = vmatprep.subr.bf16.mxu0 %v114
  %146 = vmatpush1.bf16.msra.mxu0 %v113
  %147 = vmatprep.subr.bf16.mxu0 0
  %148 = vmatpush1.bf16.msra.mxu0 0
  %149 = vmatprep.subr.bf16.mxu0 0
  %150 = vmatpush1.bf16.msra.mxu0 0
  %151 = vmatprep.subr.bf16.mxu0 0
  %152 = vmatpush1.bf16.msra.mxu0 0
  %153 = vmatprep.subr.bf16.mxu0 0
  %154 = vmatpush1.bf16.msra.mxu0 0
  %155 = vmatprep.subr.bf16.mxu0 0
  %156 = vmatpush1.bf16.msra.mxu0 0
  %157 = vmatprep.subr.bf16.mxu0 0
  %158 = vmatpush1.bf16.msra.mxu0 0
  %159 = vmatprep.subr.bf16.mxu0 0
  %160 = vmatpush1.bf16.msra.mxu0 0
  %161 = vmatprep.subr.bf16.mxu0 0
  %162 = vmatpush1.bf16.msra.mxu0 0
  %163 = vmatprep.mubr.bf16.mxu0 0
  %164 = vmatmul.mubr.bf16.gmra.mrb[0].mxu0 %v49
  %v165 = vpop.f32.mrb[0].mxu0
  %v166 = vadd.f32 0.0, %v165
  %v167 = vpop.f32.mrb[0].mxu0
  %v168 = vadd.f32 0.0, %v167
  %v169 = vpop.f32.mrb[0].mxu0
  %v170 = vadd.f32 0.0, %v169
  %v171 = vpop.f32.mrb[0].mxu0
  %v172 = vadd.f32 0.0, %v171
  %173 = vdwg.mxu0
  %v174 = vadd.f32 %v23, %v166
  %v175 = vadd.f32 %v24, %v168
  %v176 = vadd.f32 %v25, %v170
  %v177 = vadd.f32 %v26, %v172
  %178 = vst [vmem:[#allocation2] sm:$0xff] %v174
  %179 = vst [vmem:[#allocation2 + $0x8] sm:$0xff] %v175
  %180 = vst [vmem:[#allocation2 + $0x10] sm:$0xff] %v176
  %181 = vst [vmem:[#allocation2 + $0x18] sm:$0xff] %v177
  // Predicated region
  $region18: #{bert_forward.37} parent=0 // pred_check
    %p182 = pneg %p15
  $region19: #{bert_forward.37} parent=0 // pred_check_branch
    %184 = sbr.rel (%p182) target = $region21
  $region20: #{bert_forward.37} parent=0 // pred_region
    %v185 = vld [vmem:[#allocation2] sm:$0xff]
    %v186 = vld [vmem:[#allocation2 + $0x8] sm:$0xff]
    %v187 = vld [vmem:[#allocation2 + $0x10] sm:$0xff]
    %v188 = vld [vmem:[#allocation2 + $0x18] sm:$0xff]
    %v189 = vld [vmem:[%s2] sm:$0x3]
    %v191 = vlaneseq
    %v192 = vshrl.u32 %v191, 7
    %v193 = vsub.s32 0, %v192
    %v194 = vrot.slane %v189, %v193
    %v195 = vlaneseq
    %v196 = vshrl.u32 %v195, 7
    %v197 = vsub.s32 1, %v196
    %v198 = vrot.slane %v189, %v197
    %v201 = vadd.f32 %v185, %v194
    %v202 = vadd.f32 %v186, %v198
    %v203 = vadd.f32 %v187, %v194
    %v204 = vadd.f32 %v188, %v198
    %v205 = vmul.f32 %v201, 0.5
    %v206 = vmul.f32 %v202, 0.5
    %v207 = vmul.f32 %v203, 0.5
    %v208 = vmul.f32 %v204, 0.5
    %v209 = vrcp.pop 1.4142135
    %v210 = vmul.f32 %v201, %v209
    %v211 = vmul.f32 %v202, %v209
    %v212 = vmul.f32 %v203, %v209
    %v213 = vmul.f32 %v204, %v209
    %v214 = verf.f32.pop %v210
    %v215 = verf.f32.pop %v211
    %v216 = verf.f32.pop %v212
    %v217 = verf.f32.pop %v213
    %v218 = vadd.f32 %v214, 1.0
    %v219 = vadd.f32 %v215, 1.0
    %v220 = vadd.f32 %v216, 1.0
    %v221 = vadd.f32 %v217, 1.0
    %v222 = vmul.f32 %v205, %v218
    %v223 = vmul.f32 %v206, %v219
    %v224 = vmul.f32 %v207, %v220
    %v225 = vmul.f32 %v208, %v221
    %v226 = vpack.c.bf16 %v224, %v222
    %v227 = vpack.c.bf16 %v225, %v223
    %v230 = vunpack.c.l.b16 %v226
    %v231 = vunpack.c.l.b16 %v227
    %v232 = vunpack.c.h.b16 %v226
    %v233 = vunpack.c.h.b16 %v227
    %v234 = vpack.c.b16 %v231, %v230
    %v235 = vpack.c.b16 %v233, %v232
    %238 = vst [vmem:[%s3] sm:$0xff] %v234
    %239 = vst [vmem:[%s3 + $0x8] sm:$0xff] %v235
  $region21: #{bert_forward.37} parent=0 // pred_fallthru
    _
  // Predicated region
  $region22: #{bert_forward.37} parent=0 // pred_check
    _
  $region23: #{bert_forward.37} parent=0 // pred_check_branch
    %241 = sbr.rel (0) target = $region25
  $region24: #{bert_forward.37} parent=0 // pred_region
    _
  $region25: #{bert_forward.37} parent=0 // pred_fallthru
    _
  // Predicated region
  $region26: #{bert_forward.37} parent=0 // pred_check
    _
  $region27: #{bert_forward.37} parent=0 // pred_check_branch
    %243 = sbr.rel (0) target = $region29
  $region28: #{bert_forward.37} parent=0 // pred_region
    _
  $region29: #{bert_forward.37} parent=0 // pred_fallthru
    _

// kernel: bert_forward.38
$region0: #{bert_forward.38}
  #allocation0 [shape = 'u32[]', space=smem, size = 0x4, offset = 0x4, fixed_abs, tag = 'smem constant byte address 0x4 - core index']
  #allocation1 [shape = 'u32[144,128]{1,0:T(1,128)}', space=vmem, size = 0x12000, scoped, tag = 'internal scratch']
  %s0 = inlined_call_operand.vmem [shape: bf16[8,32], index: 0, kind: input, shape index: {}]
  %s1 = inlined_call_operand.vmem [shape: f32[1,32], index: 1, kind: input, shape index: {}]
  %s2 = inlined_call_operand.vmem [shape: f32[1,32], index: 2, kind: input, shape index: {}]
  %s3 = inlined_call_operand.vmem [shape: bf16[8,32], index: 3, kind: output, shape index: {}]
  %s4 = sld [smem:[#allocation0]]
  $region22: #{bert_forward.38} parent=0
    _
  %s6 = ssub.s32 1, %s4
  %s7 = scalar_select 0, %s6, %s4
  // Predicated region
  $region2: #{bert_forward.38} parent=0 // pred_check
    _
  $region3: #{bert_forward.38} parent=0 // pred_check_branch
    %9 = sbr.rel (0) target = $region5
  $region4: #{bert_forward.38} parent=0 // pred_region
    _
  $region5: #{bert_forward.38} parent=0 // pred_fallthru
    _
  // Predicated region
  $region6: #{bert_forward.38} parent=0 // pred_check
    _
  $region7: #{bert_forward.38} parent=0 // pred_check_branch
    %11 = sbr.rel (0) target = $region9
  $region8: #{bert_forward.38} parent=0 // pred_region
    _
  $region9: #{bert_forward.38} parent=0 // pred_fallthru
    _
  // Predicated region
  $region10: #{bert_forward.38} parent=0 // pred_check
    _
  $region11: #{bert_forward.38} parent=0 // pred_check_branch
    %13 = sbr.rel (0) target = $region13
  $region12: #{bert_forward.38} parent=0 // pred_region
    _
  $region13: #{bert_forward.38} parent=0 // pred_fallthru
    _
  %v14 = vld [vmem:[%s0] sm:$0xf]
  %v15 = vunpack.c.l.bf16 %v14
  %vm16 = vcmask 261120
  %v17 = vsel %vm16, %v15, 0.0
  %18 = vadd.xlane.f32.xlu0 %v17
  %v19 = vpop.xlane.xlu0 %18
  %v20 = vrcp.pop 32.0
  %v21 = vmul.f32 %v19, %v20
  %v22 = vsub.f32 %v15, %v21
  %v23 = vmul.f32 %v22, %v22
  %v24 = vsel %vm16, %v23, 0.0
  %25 = vadd.xlane.f32.xlu0 %v24
  %v26 = vpop.xlane.xlu0 %25
  %v27 = vmul.f32 %v26, %v20
  %v28 = vadd.f32 %v27, 1e-05
  %v29 = vrsqrt.pop %v28
  %v30 = vmul.f32 %v22, %v29
  %v31 = vld [vmem:[%s1] sm:$0x1]
  %v33 = vlaneseq
  %v34 = vshrl.u32 %v33, 7
  %v35 = vsub.s32 0, %v34
  %v36 = vrot.slane %v31, %v35
  %v38 = vmul.f32 %v30, %v36
  %v39 = vld [vmem:[%s2] sm:$0x1]
  %v41 = vlaneseq
  %v42 = vshrl.u32 %v41, 7
  %v43 = vsub.s32 0, %v42
  %v44 = vrot.slane %v39, %v43
  %v46 = vadd.f32 %v38, %v44
  %v47 = vpack.c.bf16 %v46, %v46
  %vm48 = vcmask 257024
  %49 = vst.msk [vmem:[%s3] sm:$0xf] %vm48, %v47
  // Predicated region
  $region14: #{bert_forward.38} parent=0 // pred_check
    _
  $region15: #{bert_forward.38} parent=0 // pred_check_branch
    %51 = sbr.rel (0) target = $region17
  $region16: #{bert_forward.38} parent=0 // pred_region
    _
  $region17: #{bert_forward.38} parent=0 // pred_fallthru
    _
  // Predicated region
  $region18: #{bert_forward.38} parent=0 // pred_check
    _
  $region19: #{bert_forward.38} parent=0 // pred_check_branch
    %53 = sbr.rel (0) target = $region21
  $region20: #{bert_forward.38} parent=0 // pred_region
    _
  $region21: #{bert_forward.38} parent=0 // pred_fallthru
    _

// kernel: bert_forward.39
$region0: #{bert_forward.39}
  #allocation0 [shape = 'u32[]', space=smem, size = 0x4, offset = 0x4, fixed_abs, tag = 'smem constant byte address 0x4 - core index']
  #allocation1 [shape = 'u32[144,128]{1,0:T(1,128)}', space=vmem, size = 0x12000, scoped, tag = 'internal scratch']
  #allocation2 [shape = 'f32[16,256]{1,0:T(8,128)}', space=vmem, size = 0x4000, scoped, tag = 'scratch operand']
  %s0 = inlined_call_operand.vmem [shape: bf16[16,128], index: 0, kind: input, shape index: {}]
  %s1 = inlined_call_operand.vmem [shape: bf16[128,256], index: 1, kind: input, shape index: {}]
  %s2 = inlined_call_operand.vmem [shape: f32[1,256], index: 2, kind: input, shape index: {}]
  %s3 = inlined_call_operand.vmem [shape: f32[16,256], index: 3, kind: output, shape index: {}]
  %s4 = sld [smem:[#allocation0]]
  $region30: #{bert_forward.39} parent=0
    _
  %s6 = ssub.s32 1, %s4
  %s7 = scalar_select 0, %s6, %s4
  // Predicated region
  $region2: #{bert_forward.39} parent=0 // pred_check
    _
  $region3: #{bert_forward.39} parent=0 // pred_check_branch
    %9 = sbr.rel (0) target = $region5
  $region4: #{bert_forward.39} parent=0 // pred_region
    _
  $region5: #{bert_forward.39} parent=0 // pred_fallthru
    _
  // Predicated region
  $region6: #{bert_forward.39} parent=0 // pred_check
    _
  $region7: #{bert_forward.39} parent=0 // pred_check_branch
    %11 = sbr.rel (0) target = $region9
  $region8: #{bert_forward.39} parent=0 // pred_region
    _
  $region9: #{bert_forward.39} parent=0 // pred_fallthru
    _
  // Predicated region
  $region10: #{bert_forward.39} parent=0 // pred_check
    _
  $region11: #{bert_forward.39} parent=0 // pred_check_branch
    %13 = sbr.rel (0) target = $region13
  $region12: #{bert_forward.39} parent=0 // pred_region
    _
  $region13: #{bert_forward.39} parent=0 // pred_fallthru
    _
  %p15 = scmp.eq.s32.totalorder 0, 0
  // Predicated region
  $region14: #{bert_forward.39} parent=0 // pred_check
    %p16 = pneg %p15
  $region15: #{bert_forward.39} parent=0 // pred_check_branch
    %18 = sbr.rel (%p16) target = $region17
  $region16: #{bert_forward.39} parent=0 // pred_region
    %19 = vst [vmem:[#allocation2] sm:$0xff] 0.0
    %20 = vst [vmem:[#allocation2 + $0x8] sm:$0xff] 0.0
    %21 = vst [vmem:[#allocation2 + $0x10] sm:$0xff] 0.0
    %22 = vst [vmem:[#allocation2 + $0x18] sm:$0xff] 0.0
  $region17: #{bert_forward.39} parent=0 // pred_fallthru
    _
  %v23 = vld [vmem:[#allocation2] sm:$0xff]
  %v24 = vld [vmem:[#allocation2 + $0x8] sm:$0xff]
  %v25 = vld [vmem:[#allocation2 + $0x10] sm:$0xff]
  %v26 = vld [vmem:[#allocation2 + $0x18] sm:$0xff]
  %v27 = vld [vmem:[%s0] sm:$0xf]
  %v28 = vld [vmem:[%s0 + $0x4] sm:$0xf]
  %v29 = vld [vmem:[%s1] sm:$0xff]
  %v30 = vld [vmem:[%s1 + $0x8] sm:$0xff]
  %v31 = vld [vmem:[%s1 + $0x10] sm:$0xff]
  %v32 = vld [vmem:[%s1 + $0x18] sm:$0xff]
  %v33 = vld [vmem:[%s1 + $0x20] sm:$0xff]
  %v34 = vld [vmem:[%s1 + $0x28] sm:$0xff]
  %v35 = vld [vmem:[%s1 + $0x30] sm:$0xff]
  %v36 = vld [vmem:[%s1 + $0x38] sm:$0xff]
  %v37 = vld [vmem:[%s1 + $0x40] sm:$0xff]
  %v38 = vld [vmem:[%s1 + $0x48] sm:$0xff]
  %v39 = vld [vmem:[%s1 + $0x50] sm:$0xff]
  %v40 = vld [vmem:[%s1 + $0x58] sm:$0xff]
  %v41 = vld [vmem:[%s1 + $0x60] sm:$0xff]
  %v42 = vld [vmem:[%s1 + $0x68] sm:$0xff]
  %v43 = vld [vmem:[%s1 + $0x70] sm:$0xff]
  %v44 = vld [vmem:[%s1 + $0x78] sm:$0xff]
  %v47 = vunpack.c.l.b16 %v27
  %v48 = vunpack.c.l.b16 %v28
  %v49 = vpack.c.b16 %v48, %v47
  %v67 = vunpack.c.l.b16 %v29
  %v68 = vunpack.c.h.b16 %v29
  %v69 = vunpack.c.l.b16 %v30
  %v70 = vunpack.c.h.b16 %v30
  %v71 = vunpack.c.l.b16 %v31
  %v72 = vunpack.c.h.b16 %v31
  %v73 = vunpack.c.l.b16 %v32
  %v74 = vunpack.c.h.b16 %v32
  %v75 = vunpack.c.l.b16 %v33
  %v76 = vunpack.c.h.b16 %v33
  %v77 = vunpack.c.l.b16 %v34
  %v78 = vunpack.c.h.b16 %v34
  %v79 = vunpack.c.l.b16 %v35
  %v80 = vunpack.c.h.b16 %v35
  %v81 = vunpack.c.l.b16 %v36
  %v82 = vunpack.c.h.b16 %v36
  %v83 = vunpack.c.l.b16 %v37
  %v84 = vunpack.c.h.b16 %v37
  %v85 = vunpack.c.l.b16 %v38
  %v86 = vunpack.c.h.b16 %v38
  %v87 = vunpack.c.l.b16 %v39
  %v88 = vunpack.c.h.b16 %v39
  %v89 = vunpack.c.l.b16 %v40
  %v90 = vunpack.c.h.b16 %v40
  %v91 = vunpack.c.l.b16 %v41
  %v92 = vunpack.c.h.b16 %v41
  %v93 = vunpack.c.l.b16 %v42
  %v94 = vunpack.c.h.b16 %v42
  %v95 = vunpack.c.l.b16 %v43
  %v96 = vunpack.c.h.b16 %v43
  %v97 = vunpack.c.l.b16 %v44
  %v98 = vunpack.c.h.b16 %v44
  %v99 = vpack.c.b16 %v69, %v67
  %v100 = vpack.c.b16 %v70, %v68
  %v101 = vpack.c.b16 %v73, %v71
  %v102 = vpack.c.b16 %v74, %v72
  %v103 = vpack.c.b16 %v77, %v75
  %v104 = vpack.c.b16 %v78, %v76
  %v105 = vpack.c.b16 %v81, %v79
  %v106 = vpack.c.b16 %v82, %v80
  %v107 = vpack.c.b16 %v85, %v83
  %v108 = vpack.c.b16 %v86, %v84
  %v109 = vpack.c.b16 %v89, %v87
  %v110 = vpack.c.b16 %v90, %v88
  %v111 = vpack.c.b16 %v93, %v91
  %v112 = vpack.c.b16 %v94, %v92
  %v113 = vpack.c.b16 %v97, %v95
  %v114 = vpack.c.b16 %v98, %v96
  %131 = vmatprep.subr.bf16.mxu0 %v100
  %132 = vmatpush1.bf16.msra.mxu0 %v99
  %133 = vmatprep.subr.bf16.mxu0 %v102
  %134 = vmatpush1.bf16.msra.mxu0 %v101
  %135 = vmatprep.subr.bf16.mxu0 %v104
  %136 = vmatpush1.bf16.msra.mxu0 %v103
  %137 = vmatprep.subr.bf16.mxu0 %v106
  %138 = vmatpush1.bf16.msra.mxu0 %v105
  %139 = vmatprep.subr.bf16.mxu0 %v108
  %140 = vmatpush1.bf16.msra.mxu0 %v107
  %141 = vmatprep.subr.bf16.mxu0 %v110
  %142 = vmatpush1.bf16.msra.mxu0 %v109
  %143 = vmatprep.subr.bf16.mxu0 %v112
  %144 = vmatpush1.bf16.msra.mxu0 %v111
  %145 = vmatprep.subr.bf16.mxu0 %v114
  %146 = vmatpush1.bf16.msra.mxu0 %v113
  %147 = vmatprep.subr.bf16.mxu0 0
  %148 = vmatpush1.bf16.msra.mxu0 0
  %149 = vmatprep.subr.bf16.mxu0 0
  %150 = vmatpush1.bf16.msra.mxu0 0
  %151 = vmatprep.subr.bf16.mxu0 0
  %152 = vmatpush1.bf16.msra.mxu0 0
  %153 = vmatprep.subr.bf16.mxu0 0
  %154 = vmatpush1.bf16.msra.mxu0 0
  %155 = vmatprep.subr.bf16.mxu0 0
  %156 = vmatpush1.bf16.msra.mxu0 0
  %157 = vmatprep.subr.bf16.mxu0 0
  %158 = vmatpush1.bf16.msra.mxu0 0
  %159 = vmatprep.subr.bf16.mxu0 0
  %160 = vmatpush1.bf16.msra.mxu0 0
  %161 = vmatprep.subr.bf16.mxu0 0
  %162 = vmatpush1.bf16.msra.mxu0 0
  %163 = vmatprep.mubr.bf16.mxu0 0
  %164 = vmatmul.mubr.bf16.gmra.mrb[0].mxu0 %v49
  %v165 = vpop.f32.mrb[0].mxu0
  %v166 = vadd.f32 0.0, %v165
  %v167 = vpop.f32.mrb[0].mxu0
  %v168 = vadd.f32 0.0, %v167
  %v169 = vpop.f32.mrb[0].mxu0
  %v170 = vadd.f32 0.0, %v169
  %v171 = vpop.f32.mrb[0].mxu0
  %v172 = vadd.f32 0.0, %v171
  %173 = vdwg.mxu0
  %v174 = vadd.f32 %v23, %v166
  %v175 = vadd.f32 %v24, %v168
  %v176 = vadd.f32 %v25, %v170
  %v177 = vadd.f32 %v26, %v172
  %178 = vst [vmem:[#allocation2] sm:$0xff] %v174
  %179 = vst [vmem:[#allocation2 + $0x8] sm:$0xff] %v175
  %180 = vst [vmem:[#allocation2 + $0x10] sm:$0xff] %v176
  %181 = vst [vmem:[#allocation2 + $0x18] sm:$0xff] %v177
  // Predicated region
  $region18: #{bert_forward.39} parent=0 // pred_check
    %p182 = pneg %p15
  $region19: #{bert_forward.39} parent=0 // pred_check_branch
    %184 = sbr.rel (%p182) target = $region21
  $region20: #{bert_forward.39} parent=0 // pred_region
    %v185 = vld [vmem:[#allocation2] sm:$0xff]
    %v186 = vld [vmem:[#allocation2 + $0x8] sm:$0xff]
    %v187 = vld [vmem:[#allocation2 + $0x10] sm:$0xff]
    %v188 = vld [vmem:[#allocation2 + $0x18] sm:$0xff]
    %v189 = vld [vmem:[%s2] sm:$0x3]
    %v191 = vlaneseq
    %v192 = vshrl.u32 %v191, 7
    %v193 = vsub.s32 0, %v192
    %v194 = vrot.slane %v189, %v193
    %v195 = vlaneseq
    %v196 = vshrl.u32 %v195, 7
    %v197 = vsub.s32 1, %v196
    %v198 = vrot.slane %v189, %v197
    %v201 = vadd.f32 %v185, %v194
    %v202 = vadd.f32 %v186, %v198
    %v203 = vadd.f32 %v187, %v194
    %v204 = vadd.f32 %v188, %v198
    %205 = vst [vmem:[%s3] sm:$0xff] %v201
    %206 = vst [vmem:[%s3 + $0x8] sm:$0xff] %v202
    %207 = vst [vmem:[%s3 + $0x10] sm:$0xff] %v203
    %208 = vst [vmem:[%s3 + $0x18] sm:$0xff] %v204
  $region21: #{bert_forward.39} parent=0 // pred_fallthru
    _
  // Predicated region
  $region22: #{bert_forward.39} parent=0 // pred_check
    _
  $region23: #{bert_forward.39} parent=0 // pred_check_branch
    %210 = sbr.rel (0) target = $region25
  $region24: #{bert_forward.39} parent=0 // pred_region
    _
  $region25: #{bert_forward.39} parent=0 // pred_fallthru
    _
  // Predicated region
  $region26: #{bert_forward.39} parent=0 // pred_check
    _
  $region27: #{bert_forward.39} parent=0 // pred_check_branch
    %212 = sbr.rel (0) target = $region29
  $region28: #{bert_forward.39} parent=0 // pred_region
    _
  $region29: #{bert_forward.39} parent=0 // pred_fallthru
    _

// kernel: bert_forward.35
$region0: #{bert_forward.35}
  #allocation0 [shape = 'u32[]', space=smem, size = 0x4, offset = 0x4, fixed_abs, tag = 'smem constant byte address 0x4 - core index']
  #allocation1 [shape = 'u32[144,128]{1,0:T(1,128)}', space=vmem, size = 0x12000, scoped, tag = 'internal scratch']
  #allocation2 [shape = 'f32[16,256]{1,0:T(8,128)}', space=vmem, size = 0x4000, scoped, tag = 'scratch operand']
  %s0 = inlined_call_operand.vmem [shape: bf16[16,128], index: 0, kind: input, shape index: {}]
  %s1 = inlined_call_operand.vmem [shape: bf16[128,256], index: 1, kind: input, shape index: {}]
  %s2 = inlined_call_operand.vmem [shape: f32[1,256], index: 2, kind: input, shape index: {}]
  %s3 = inlined_call_operand.vmem [shape: bf16[16,256], index: 3, kind: output, shape index: {}]
  %s4 = sld [smem:[#allocation0]]
  $region30: #{bert_forward.35} parent=0
    _
  %s6 = ssub.s32 1, %s4
  %s7 = scalar_select 0, %s6, %s4
  // Predicated region
  $region2: #{bert_forward.35} parent=0 // pred_check
    _
  $region3: #{bert_forward.35} parent=0 // pred_check_branch
    %9 = sbr.rel (0) target = $region5
  $region4: #{bert_forward.35} parent=0 // pred_region
    _
  $region5: #{bert_forward.35} parent=0 // pred_fallthru
    _
  // Predicated region
  $region6: #{bert_forward.35} parent=0 // pred_check
    _
  $region7: #{bert_forward.35} parent=0 // pred_check_branch
    %11 = sbr.rel (0) target = $region9
  $region8: #{bert_forward.35} parent=0 // pred_region
    _
  $region9: #{bert_forward.35} parent=0 // pred_fallthru
    _
  // Predicated region
  $region10: #{bert_forward.35} parent=0 // pred_check
    _
  $region11: #{bert_forward.35} parent=0 // pred_check_branch
    %13 = sbr.rel (0) target = $region13
  $region12: #{bert_forward.35} parent=0 // pred_region
    _
  $region13: #{bert_forward.35} parent=0 // pred_fallthru
    _
  %p15 = scmp.eq.s32.totalorder 0, 0
  // Predicated region
  $region14: #{bert_forward.35} parent=0 // pred_check
    %p16 = pneg %p15
  $region15: #{bert_forward.35} parent=0 // pred_check_branch
    %18 = sbr.rel (%p16) target = $region17
  $region16: #{bert_forward.35} parent=0 // pred_region
    %19 = vst [vmem:[#allocation2] sm:$0xff] 0.0
    %20 = vst [vmem:[#allocation2 + $0x8] sm:$0xff] 0.0
    %21 = vst [vmem:[#allocation2 + $0x10] sm:$0xff] 0.0
    %22 = vst [vmem:[#allocation2 + $0x18] sm:$0xff] 0.0
  $region17: #{bert_forward.35} parent=0 // pred_fallthru
    _
  %v23 = vld [vmem:[#allocation2] sm:$0xff]
  %v24 = vld [vmem:[#allocation2 + $0x8] sm:$0xff]
  %v25 = vld [vmem:[#allocation2 + $0x10] sm:$0xff]
  %v26 = vld [vmem:[#allocation2 + $0x18] sm:$0xff]
  %v27 = vld [vmem:[%s0] sm:$0xf]
  %v28 = vld [vmem:[%s0 + $0x4] sm:$0xf]
  %v29 = vld [vmem:[%s1] sm:$0xff]
  %v30 = vld [vmem:[%s1 + $0x8] sm:$0xff]
  %v31 = vld [vmem:[%s1 + $0x10] sm:$0xff]
  %v32 = vld [vmem:[%s1 + $0x18] sm:$0xff]
  %v33 = vld [vmem:[%s1 + $0x20] sm:$0xff]
  %v34 = vld [vmem:[%s1 + $0x28] sm:$0xff]
  %v35 = vld [vmem:[%s1 + $0x30] sm:$0xff]
  %v36 = vld [vmem:[%s1 + $0x38] sm:$0xff]
  %v37 = vld [vmem:[%s1 + $0x40] sm:$0xff]
  %v38 = vld [vmem:[%s1 + $0x48] sm:$0xff]
  %v39 = vld [vmem:[%s1 + $0x50] sm:$0xff]
  %v40 = vld [vmem:[%s1 + $0x58] sm:$0xff]
  %v41 = vld [vmem:[%s1 + $0x60] sm:$0xff]
  %v42 = vld [vmem:[%s1 + $0x68] sm:$0xff]
  %v43 = vld [vmem:[%s1 + $0x70] sm:$0xff]
  %v44 = vld [vmem:[%s1 + $0x78] sm:$0xff]
  %v47 = vunpack.c.l.b16 %v27
  %v48 = vunpack.c.l.b16 %v28
  %v49 = vpack.c.b16 %v48, %v47
  %v67 = vunpack.c.l.b16 %v29
  %v68 = vunpack.c.h.b16 %v29
  %v69 = vunpack.c.l.b16 %v30
  %v70 = vunpack.c.h.b16 %v30
  %v71 = vunpack.c.l.b16 %v31
  %v72 = vunpack.c.h.b16 %v31
  %v73 = vunpack.c.l.b16 %v32
  %v74 = vunpack.c.h.b16 %v32
  %v75 = vunpack.c.l.b16 %v33
  %v76 = vunpack.c.h.b16 %v33
  %v77 = vunpack.c.l.b16 %v34
  %v78 = vunpack.c.h.b16 %v34
  %v79 = vunpack.c.l.b16 %v35
  %v80 = vunpack.c.h.b16 %v35
  %v81 = vunpack.c.l.b16 %v36
  %v82 = vunpack.c.h.b16 %v36
  %v83 = vunpack.c.l.b16 %v37
  %v84 = vunpack.c.h.b16 %v37
  %v85 = vunpack.c.l.b16 %v38
  %v86 = vunpack.c.h.b16 %v38
  %v87 = vunpack.c.l.b16 %v39
  %v88 = vunpack.c.h.b16 %v39
  %v89 = vunpack.c.l.b16 %v40
  %v90 = vunpack.c.h.b16 %v40
  %v91 = vunpack.c.l.b16 %v41
  %v92 = vunpack.c.h.b16 %v41
  %v93 = vunpack.c.l.b16 %v42
  %v94 = vunpack.c.h.b16 %v42
  %v95 = vunpack.c.l.b16 %v43
  %v96 = vunpack.c.h.b16 %v43
  %v97 = vunpack.c.l.b16 %v44
  %v98 = vunpack.c.h.b16 %v44
  %v99 = vpack.c.b16 %v69, %v67
  %v100 = vpack.c.b16 %v70, %v68
  %v101 = vpack.c.b16 %v73, %v71
  %v102 = vpack.c.b16 %v74, %v72
  %v103 = vpack.c.b16 %v77, %v75
  %v104 = vpack.c.b16 %v78, %v76
  %v105 = vpack.c.b16 %v81, %v79
  %v106 = vpack.c.b16 %v82, %v80
  %v107 = vpack.c.b16 %v85, %v83
  %v108 = vpack.c.b16 %v86, %v84
  %v109 = vpack.c.b16 %v89, %v87
  %v110 = vpack.c.b16 %v90, %v88
  %v111 = vpack.c.b16 %v93, %v91
  %v112 = vpack.c.b16 %v94, %v92
  %v113 = vpack.c.b16 %v97, %v95
  %v114 = vpack.c.b16 %v98, %v96
  %131 = vmatprep.subr.bf16.mxu0 %v100
  %132 = vmatpush1.bf16.msra.mxu0 %v99
  %133 = vmatprep.subr.bf16.mxu0 %v102
  %134 = vmatpush1.bf16.msra.mxu0 %v101
  %135 = vmatprep.subr.bf16.mxu0 %v104
  %136 = vmatpush1.bf16.msra.mxu0 %v103
  %137 = vmatprep.subr.bf16.mxu0 %v106
  %138 = vmatpush1.bf16.msra.mxu0 %v105
  %139 = vmatprep.subr.bf16.mxu0 %v108
  %140 = vmatpush1.bf16.msra.mxu0 %v107
  %141 = vmatprep.subr.bf16.mxu0 %v110
  %142 = vmatpush1.bf16.msra.mxu0 %v109
  %143 = vmatprep.subr.bf16.mxu0 %v112
  %144 = vmatpush1.bf16.msra.mxu0 %v111
  %145 = vmatprep.subr.bf16.mxu0 %v114
  %146 = vmatpush1.bf16.msra.mxu0 %v113
  %147 = vmatprep.subr.bf16.mxu0 0
  %148 = vmatpush1.bf16.msra.mxu0 0
  %149 = vmatprep.subr.bf16.mxu0 0
  %150 = vmatpush1.bf16.msra.mxu0 0
  %151 = vmatprep.subr.bf16.mxu0 0
  %152 = vmatpush1.bf16.msra.mxu0 0
  %153 = vmatprep.subr.bf16.mxu0 0
  %154 = vmatpush1.bf16.msra.mxu0 0
  %155 = vmatprep.subr.bf16.mxu0 0
  %156 = vmatpush1.bf16.msra.mxu0 0
  %157 = vmatprep.subr.bf16.mxu0 0
  %158 = vmatpush1.bf16.msra.mxu0 0
  %159 = vmatprep.subr.bf16.mxu0 0
  %160 = vmatpush1.bf16.msra.mxu0 0
  %161 = vmatprep.subr.bf16.mxu0 0
  %162 = vmatpush1.bf16.msra.mxu0 0
  %163 = vmatprep.mubr.bf16.mxu0 0
  %164 = vmatmul.mubr.bf16.gmra.mrb[0].mxu0 %v49
  %v165 = vpop.f32.mrb[0].mxu0
  %v166 = vadd.f32 0.0, %v165
  %v167 = vpop.f32.mrb[0].mxu0
  %v168 = vadd.f32 0.0, %v167
  %v169 = vpop.f32.mrb[0].mxu0
  %v170 = vadd.f32 0.0, %v169
  %v171 = vpop.f32.mrb[0].mxu0
  %v172 = vadd.f32 0.0, %v171
  %173 = vdwg.mxu0
  %v174 = vadd.f32 %v23, %v166
  %v175 = vadd.f32 %v24, %v168
  %v176 = vadd.f32 %v25, %v170
  %v177 = vadd.f32 %v26, %v172
  %178 = vst [vmem:[#allocation2] sm:$0xff] %v174
  %179 = vst [vmem:[#allocation2 + $0x8] sm:$0xff] %v175
  %180 = vst [vmem:[#allocation2 + $0x10] sm:$0xff] %v176
  %181 = vst [vmem:[#allocation2 + $0x18] sm:$0xff] %v177
  // Predicated region
  $region18: #{bert_forward.35} parent=0 // pred_check
    %p182 = pneg %p15
  $region19: #{bert_forward.35} parent=0 // pred_check_branch
    %184 = sbr.rel (%p182) target = $region21
  $region20: #{bert_forward.35} parent=0 // pred_region
    %v185 = vld [vmem:[#allocation2] sm:$0xff]
    %v186 = vld [vmem:[#allocation2 + $0x8] sm:$0xff]
    %v187 = vld [vmem:[#allocation2 + $0x10] sm:$0xff]
    %v188 = vld [vmem:[#allocation2 + $0x18] sm:$0xff]
    %v189 = vld [vmem:[%s2] sm:$0x3]
    %v191 = vlaneseq
    %v192 = vshrl.u32 %v191, 7
    %v193 = vsub.s32 0, %v192
    %v194 = vrot.slane %v189, %v193
    %v195 = vlaneseq
    %v196 = vshrl.u32 %v195, 7
    %v197 = vsub.s32 1, %v196
    %v198 = vrot.slane %v189, %v197
    %v201 = vadd.f32 %v185, %v194
    %v202 = vadd.f32 %v186, %v198
    %v203 = vadd.f32 %v187, %v194
    %v204 = vadd.f32 %v188, %v198
    %v205 = vtanh.pop %v201
    %v206 = vtanh.pop %v202
    %v207 = vtanh.pop %v203
    %v208 = vtanh.pop %v204
    %v209 = vpack.c.bf16 %v207, %v205
    %v210 = vpack.c.bf16 %v208, %v206
    %v213 = vunpack.c.l.b16 %v209
    %v214 = vunpack.c.l.b16 %v210
    %v215 = vunpack.c.h.b16 %v209
    %v216 = vunpack.c.h.b16 %v210
    %v217 = vpack.c.b16 %v214, %v213
    %v218 = vpack.c.b16 %v216, %v215
    %221 = vst [vmem:[%s3] sm:$0xff] %v217
    %222 = vst [vmem:[%s3 + $0x8] sm:$0xff] %v218
  $region21: #{bert_forward.35} parent=0 // pred_fallthru
    _
  // Predicated region
  $region22: #{bert_forward.35} parent=0 // pred_check
    _
  $region23: #{bert_forward.35} parent=0 // pred_check_branch
    %224 = sbr.rel (0) target = $region25
  $region24: #{bert_forward.35} parent=0 // pred_region
    _
  $region25: #{bert_forward.35} parent=0 // pred_fallthru
    _
  // Predicated region
  $region26: #{bert_forward.35} parent=0 // pred_check
    _
  $region27: #{bert_forward.35} parent=0 // pred_check_branch
    %226 = sbr.rel (0) target = $region29
  $region28: #{bert_forward.35} parent=0 // pred_region
    _
  $region29: #{bert_forward.35} parent=0 // pred_fallthru
    _

</llo_original>
